<compile_context>
chip_gen: v7x
topology: tpu7x:2x2x1
jax: 0.10.0
libtpu: 0.0.40
codegen_flags: <defaults>
</compile_context>

<pallas_src>
import jax
import jax.numpy as jnp
from jax.experimental import pallas as pl
from jax.experimental.pallas import tpu as pltpu


def _leaky_relu(t, slope=0.2):
    return jnp.where(t > 0, t, slope * t)


def _round_up(n, m):
    return ((n + m - 1) // m) * m


# ----------------------------------------------------------------------------
# Kernel
# ----------------------------------------------------------------------------
def q_forward_kernel(
    xy_ref,
    wy1_ref, by1_ref, wy2_ref, by2_ref, wy3_ref, by3_ref,
    w1x_ref, w1h_ref, b1_ref, w2_ref, b2_ref, w3_ref, b3_ref,
    whead_ref, bhead_ref,
    out_ref,
):
    f32 = jnp.float32
    xy = xy_ref[...]  # packed [x | y], width P+S

    # ---- y_fc_layers: 3 x (Linear(Hp) + LeakyReLU(0.2)) ----
    # wy1 is lifted to (P+S, Hp) with zero rows for x, so xy @ wy1 == y @ Wy1.
    hy = _leaky_relu(
        jnp.dot(xy, wy1_ref[...], preferred_element_type=f32) + by1_ref[...]
    )
    hy = _leaky_relu(
        jnp.dot(hy, wy2_ref[...], preferred_element_type=f32) + by2_ref[...]
    )
    hy = _leaky_relu(
        jnp.dot(hy, wy3_ref[...], preferred_element_type=f32) + by3_ref[...]
    )

    # ---- fc_layers: split-W1 accumulate (no VMEM concat) ----
    # w1x lifted to (P+S, Hp) with zero rows for y, so xy @ w1x == x @ W1[:P].
    h = _leaky_relu(
        jnp.dot(xy, w1x_ref[...], preferred_element_type=f32)
        + jnp.dot(hy, w1h_ref[...], preferred_element_type=f32)
        + b1_ref[...]
    )
    h = _leaky_relu(
        jnp.dot(h, w2_ref[...], preferred_element_type=f32) + b2_ref[...]
    )
    h = _leaky_relu(
        jnp.dot(h, w3_ref[...], preferred_element_type=f32) + b3_ref[...]
    )

    # ---- fused, lane-dense head: [mean | log_var | zero-pad] -> 128 lanes ----
    out_ref[...] = (
        jnp.dot(h, whead_ref[...], preferred_element_type=f32) + bhead_ref[...]
    ).astype(out_ref.dtype)


# ----------------------------------------------------------------------------
# Host-side weight repacking (zero-padding is numerically exact)
# ----------------------------------------------------------------------------
def prepare_kernel_params(p, *, signal_dim, param_dim, hidden_dim, latent_dim):
    Hp = _round_up(hidden_dim, 128)          # lane-dense hidden width
    IN = param_dim + signal_dim              # packed [x | y] input width
    OUTW = _round_up(2 * latent_dim, 128)    # lane-dense head output width
    f32 = jnp.float32

    def pad2(w, rows, cols):
        return jnp.zeros((rows, cols), f32).at[: w.shape[0], : w.shape[1]].set(w)

    def padb(b, cols):
        return jnp.zeros((1, cols), f32).at[:, : b.shape[1]].set(b)

    # y path: lift Wy1 (S, H) -> (IN, Hp); x rows (0:P) stay zero.
    wy1 = jnp.zeros((IN, Hp), f32).at[param_dim:, :hidden_dim].set(p["wy1"])
    wy2 = pad2(p["wy2"], Hp, Hp)
    wy3 = pad2(p["wy3"], Hp, Hp)

    # fc layer 1 split: x part lifted to (IN, Hp) (y rows zero), hy part (Hp, Hp).
    w1x = jnp.zeros((IN, Hp), f32).at[:param_dim, :hidden_dim].set(
        p["w1"][:param_dim]
    )
    w1h = pad2(p["w1"][param_dim:], Hp, Hp)
    w2 = pad2(p["w2"], Hp, Hp)
    w3 = pad2(p["w3"], Hp, Hp)

    # fused head: mean at cols [0:L), log_var at [L:2L), rest zero.
    whead = jnp.zeros((Hp, OUTW), f32)
    whead = whead.at[:hidden_dim, :latent_dim].set(p["wm"])
    whead = whead.at[:hidden_dim, latent_dim:2 * latent_dim].set(p["wv"])
    bhead = jnp.zeros((1, OUTW), f32)
    bhead = bhead.at[:, :latent_dim].set(p["bm"])
    bhead = bhead.at[:, latent_dim:2 * latent_dim].set(p["bv"])

    return dict(
        wy1=wy1, by1=padb(p["by1"], Hp),
        wy2=wy2, by2=padb(p["by2"], Hp),
        wy3=wy3, by3=padb(p["by3"], Hp),
        w1x=w1x, w1h=w1h, b1=padb(p["b1"], Hp),
        w2=w2, b2=padb(p["b2"], Hp),
        w3=w3, b3=padb(p["b3"], Hp),
        whead=whead, bhead=bhead,
    )


# ----------------------------------------------------------------------------
# Wrapper
# ----------------------------------------------------------------------------
def q_forward(x, y, kparams, *, latent_dim, batch_block=512):
    """Pallas-backed equivalent of Q.forward(x, y) -> (mean, log_var)."""
    B, param_dim = x.shape
    signal_dim = y.shape[1]
    IN = param_dim + signal_dim
    Hp = kparams["whead"].shape[0]
    OUTW = kparams["whead"].shape[1]

    # Pack [x | y] into one input array -> one lane-contiguous DMA per step.
    xy = jnp.concatenate([x, y], axis=1)

    # Batch tiling: big blocks (weights are resident, per-step activation
    # traffic is tiny); give large batches >= 2 grid steps so the "parallel"
    # axis can shard across v7x's 2 TensorCores.
    if B > batch_block:
        tb = batch_block
    elif B >= 256:
        tb = _round_up(pl.cdiv(B, 2), 8)
    else:
        tb = B
    grid = (pl.cdiv(B, tb),)

    def row_block(d):
        # activation/output blocks: tiled along batch, full feature width.
        return pl.BlockSpec((tb, d), lambda i: (i, 0))

    def resident(shape):
        # weights/biases: full array, constant index_map -> VMEM-resident.
        # TODO(synk): pipeline_mode=pl.Buffered(1) here for v7x's 64 MiB VMEM
        # once hidden_dim grows (double-buffering resident weights is waste).
        return pl.BlockSpec(shape, lambda i: (0, 0))

    operands = (
        xy,
        kparams["wy1"], kparams["by1"], kparams["wy2"], kparams["by2"],
        kparams["wy3"], kparams["by3"],
        kparams["w1x"], kparams["w1h"], kparams["b1"],
        kparams["w2"], kparams["b2"], kparams["w3"], kparams["b3"],
        kparams["whead"], kparams["bhead"],
    )
    in_specs = [row_block(IN)] + [resident(op.shape) for op in operands[1:]]

    # Advisory cost estimate (now includes the packed x/y input bytes).
    flops = 2 * B * (2 * IN * Hp + 5 * Hp * Hp + Hp * OUTW)
    bytes_accessed = (
        sum(int(op.size) * op.dtype.itemsize for op in operands)
        + B * OUTW * 4
    )

    out = pl.pallas_call(
        q_forward_kernel,
        out_shape=jax.ShapeDtypeStruct((B, OUTW), jnp.float32),
        grid_spec=pltpu.PrefetchScalarGridSpec(
            num_scalar_prefetch=0,
            grid=grid,
            in_specs=in_specs,
            out_specs=row_block(OUTW),
        ),
        compiler_params=pltpu.CompilerParams(
            dimension_semantics=("parallel",),
            vmem_limit_bytes=64 * 1024 * 1024,
        ),
        cost_estimate=pl.CostEstimate(
            flops=flops, transcendentals=0, bytes_accessed=bytes_accessed
        ),
    )(*operands)

    mean = out[:, :latent_dim]
    log_var = out[:, latent_dim:2 * latent_dim]
    return mean, log_var


# ----------------------------------------------------------------------------
# Synthetic weights + pure-JAX reference (mirrors the PyTorch module)
# ----------------------------------------------------------------------------
def init_params(key, signal_dim, param_dim, hidden_dim, latent_dim):
    ks = jax.random.split(key, 8)

    def lin(k, fan_in, fan_out):
        kw, kb = jax.random.split(k)
        bound = 1.0 / jnp.sqrt(fan_in)
        w = jax.random.uniform(kw, (fan_in, fan_out), jnp.float32, -bound, bound)
        b = jax.random.uniform(kb, (1, fan_out), jnp.float32, -bound, bound)
        return w, b

    wy1, by1 = lin(ks[0], signal_dim, hidden_dim)
    wy2, by2 = lin(ks[1], hidden_dim, hidden_dim)
    wy3, by3 = lin(ks[2], hidden_dim, hidden_dim)
    w1, b1 = lin(ks[3], param_dim + hidden_dim, hidden_dim)   # acts on [x | hy]
    w2, b2 = lin(ks[4], hidden_dim, hidden_dim)
    w3, b3 = lin(ks[5], hidden_dim, hidden_dim)
    wm, bm = lin(ks[6], hidden_dim, latent_dim)
    wv, bv = lin(ks[7], hidden_dim, latent_dim)

    return dict(
        wy1=wy1, by1=by1, wy2=wy2, by2=by2, wy3=wy3, by3=by3,
        w1=w1, b1=b1, w2=w2, b2=b2, w3=w3, b3=b3,
        wm=wm, bm=bm, wv=wv, bv=bv,
    )


def q_forward_ref(x, y, p):
    act = lambda t: jnp.where(t > 0, t, 0.2 * t)
    hy = act(y @ p["wy1"] + p["by1"])
    hy = act(hy @ p["wy2"] + p["by2"])
    hy = act(hy @ p["wy3"] + p["by3"])
    xhy = jnp.concatenate([x, hy], axis=1)
    h = act(xhy @ p["w1"] + p["b1"])
    h = act(h @ p["w2"] + p["b2"])
    h = act(h @ p["w3"] + p["b3"])
    mean = h @ p["wm"] + p["bm"]
    log_var = h @ p["wv"] + p["bv"]
    return mean, log_var


if __name__ == "__main__":
    signal_dim, param_dim, hidden_dim, latent_dim = 16, 4, 32, 8

    key = jax.random.PRNGKey(0)
    kx, ky, kp, kx2, ky2 = jax.random.split(key, 5)
    params = init_params(kp, signal_dim, param_dim, hidden_dim, latent_dim)
    kparams = prepare_kernel_params(
        params, signal_dim=signal_dim, param_dim=param_dim,
        hidden_dim=hidden_dim, latent_dim=latent_dim,
    )

    q_fn = jax.jit(q_forward, static_argnames=("latent_dim", "batch_block"))

    # --- small batch (single grid step) ---
    B = 8
    x = jax.random.normal(kx, (B, param_dim), jnp.float32)
    y = jax.random.normal(ky, (B, signal_dim), jnp.float32)
    mean, log_var = q_fn(x, y, kparams, latent_dim=latent_dim)
    jax.block_until_ready((mean, log_var))
    mean_ref, log_var_ref = q_forward_ref(x, y, params)
    assert jnp.allclose(mean, mean_ref, atol=1e-5, rtol=1e-5)
    assert jnp.allclose(log_var, log_var_ref, atol=1e-5, rtol=1e-5)

    # --- larger, non-multiple batch (>= 2 grid steps, padded last block) ---
    B2 = 260
    x2 = jax.random.normal(kx2, (B2, param_dim), jnp.float32)
    y2 = jax.random.normal(ky2, (B2, signal_dim), jnp.float32)
    mean2, log_var2 = q_fn(x2, y2, kparams, latent_dim=latent_dim)
    jax.block_until_ready((mean2, log_var2))
    mean2_ref, log_var2_ref = q_forward_ref(x2, y2, params)
    assert jnp.allclose(mean2, mean2_ref, atol=1e-5, rtol=1e-5)
    assert jnp.allclose(log_var2, log_var2_ref, atol=1e-5, rtol=1e-5)

    print("KERNEL_OK")
</pallas_src>

<mosaic_0001>
module attributes {stable_mosaic.version = 11 : i64} {
  func.func @q_forward_kernel(%arg0: i32, %arg1: memref<8x20xf32, #tpu.memory_space<vmem>>, %arg2: memref<20x128xf32, #tpu.memory_space<vmem>>, %arg3: memref<1x128xf32, #tpu.memory_space<vmem>>, %arg4: memref<128x128xf32, #tpu.memory_space<vmem>>, %arg5: memref<1x128xf32, #tpu.memory_space<vmem>>, %arg6: memref<128x128xf32, #tpu.memory_space<vmem>>, %arg7: memref<1x128xf32, #tpu.memory_space<vmem>>, %arg8: memref<20x128xf32, #tpu.memory_space<vmem>>, %arg9: memref<128x128xf32, #tpu.memory_space<vmem>>, %arg10: memref<1x128xf32, #tpu.memory_space<vmem>>, %arg11: memref<128x128xf32, #tpu.memory_space<vmem>>, %arg12: memref<1x128xf32, #tpu.memory_space<vmem>>, %arg13: memref<128x128xf32, #tpu.memory_space<vmem>>, %arg14: memref<1x128xf32, #tpu.memory_space<vmem>>, %arg15: memref<128x128xf32, #tpu.memory_space<vmem>>, %arg16: memref<1x128xf32, #tpu.memory_space<vmem>>, %arg17: memref<8x128xf32, #tpu.memory_space<vmem>>) attributes {dimension_semantics = [#tpu.dimension_semantics<parallel>], iteration_bounds = array<i64: 1>, scalar_prefetch = 0 : i64, scratch_operands = 0 : i64, tpu.core_type = #tpu.core_type<tc>, window_params = [{transform_indices = @transform_0, window_bounds = array<i64: 8, 20>}, {pipeline_mode = #tpu.pipeline_mode<synchronous>, transform_indices = @transform_1, window_bounds = array<i64: 20, 128>}, {pipeline_mode = #tpu.pipeline_mode<synchronous>, transform_indices = @transform_2, window_bounds = array<i64: 1, 128>}, {pipeline_mode = #tpu.pipeline_mode<synchronous>, transform_indices = @transform_3, window_bounds = array<i64: 128, 128>}, {pipeline_mode = #tpu.pipeline_mode<synchronous>, transform_indices = @transform_4, window_bounds = array<i64: 1, 128>}, {pipeline_mode = #tpu.pipeline_mode<synchronous>, transform_indices = @transform_5, window_bounds = array<i64: 128, 128>}, {pipeline_mode = #tpu.pipeline_mode<synchronous>, transform_indices = @transform_6, window_bounds = array<i64: 1, 128>}, {pipeline_mode = #tpu.pipeline_mode<synchronous>, transform_indices = @transform_7, window_bounds = array<i64: 20, 128>}, {pipeline_mode = #tpu.pipeline_mode<synchronous>, transform_indices = @transform_8, window_bounds = array<i64: 128, 128>}, {pipeline_mode = #tpu.pipeline_mode<synchronous>, transform_indices = @transform_9, window_bounds = array<i64: 1, 128>}, {pipeline_mode = #tpu.pipeline_mode<synchronous>, transform_indices = @transform_10, window_bounds = array<i64: 128, 128>}, {pipeline_mode = #tpu.pipeline_mode<synchronous>, transform_indices = @transform_11, window_bounds = array<i64: 1, 128>}, {pipeline_mode = #tpu.pipeline_mode<synchronous>, transform_indices = @transform_12, window_bounds = array<i64: 128, 128>}, {pipeline_mode = #tpu.pipeline_mode<synchronous>, transform_indices = @transform_13, window_bounds = array<i64: 1, 128>}, {pipeline_mode = #tpu.pipeline_mode<synchronous>, transform_indices = @transform_14, window_bounds = array<i64: 128, 128>}, {pipeline_mode = #tpu.pipeline_mode<synchronous>, transform_indices = @transform_15, window_bounds = array<i64: 1, 128>}, {transform_indices = @transform_16, window_bounds = array<i64: 8, 128>}]} {
    %c0 = arith.constant 0 : index
    %c0_0 = arith.constant 0 : index
    %0 = vector.load %arg1[%c0, %c0_0] : memref<8x20xf32, #tpu.memory_space<vmem>>, vector<8x20xf32>
    %c0_1 = arith.constant 0 : index
    %c0_2 = arith.constant 0 : index
    %1 = vector.load %arg2[%c0_1, %c0_2] : memref<20x128xf32, #tpu.memory_space<vmem>>, vector<20x128xf32>
    %cst = arith.constant dense<0.000000e+00> : vector<8x128xf32>
    %2 = tpu.matmul %0, %1, %cst {dimension_numbers = #tpu.dot_dimension_numbers<[1], [0], [0], [1], [0, 0, 1, 1], [], []>} : vector<8x20xf32>, vector<20x128xf32>, vector<8x128xf32> -> vector<8x128xf32>
    %c0_3 = arith.constant 0 : index
    %c0_4 = arith.constant 0 : index
    %3 = vector.load %arg3[%c0_3, %c0_4] : memref<1x128xf32, #tpu.memory_space<vmem>>, vector<1x128xf32>
    %4 = vector.broadcast %3 : vector<1x128xf32> to vector<8x128xf32>
    %5 = arith.addf %2, %4 : vector<8x128xf32>
    %cst_5 = arith.constant 0.000000e+00 : f32
    %6 = vector.broadcast %cst_5 : f32 to vector<8x128xf32>
    %7 = arith.cmpf ogt, %5, %6 : vector<8x128xf32>
    %cst_6 = arith.constant 2.000000e-01 : f32
    %8 = vector.broadcast %cst_6 : f32 to vector<8x128xf32>
    %9 = arith.mulf %8, %5 : vector<8x128xf32>
    %10 = arith.select %7, %5, %9 : vector<8x128xi1>, vector<8x128xf32>
    %c0_7 = arith.constant 0 : index
    %c0_8 = arith.constant 0 : index
    %11 = vector.load %arg4[%c0_7, %c0_8] : memref<128x128xf32, #tpu.memory_space<vmem>>, vector<128x128xf32>
    %cst_9 = arith.constant dense<0.000000e+00> : vector<8x128xf32>
    %12 = tpu.matmul %10, %11, %cst_9 {dimension_numbers = #tpu.dot_dimension_numbers<[1], [0], [0], [1], [0, 0, 1, 1], [], []>} : vector<8x128xf32>, vector<128x128xf32>, vector<8x128xf32> -> vector<8x128xf32>
    %c0_10 = arith.constant 0 : index
    %c0_11 = arith.constant 0 : index
    %13 = vector.load %arg5[%c0_10, %c0_11] : memref<1x128xf32, #tpu.memory_space<vmem>>, vector<1x128xf32>
    %14 = vector.broadcast %13 : vector<1x128xf32> to vector<8x128xf32>
    %15 = arith.addf %12, %14 : vector<8x128xf32>
    %cst_12 = arith.constant 0.000000e+00 : f32
    %16 = vector.broadcast %cst_12 : f32 to vector<8x128xf32>
    %17 = arith.cmpf ogt, %15, %16 : vector<8x128xf32>
    %cst_13 = arith.constant 2.000000e-01 : f32
    %18 = vector.broadcast %cst_13 : f32 to vector<8x128xf32>
    %19 = arith.mulf %18, %15 : vector<8x128xf32>
    %20 = arith.select %17, %15, %19 : vector<8x128xi1>, vector<8x128xf32>
    %c0_14 = arith.constant 0 : index
    %c0_15 = arith.constant 0 : index
    %21 = vector.load %arg6[%c0_14, %c0_15] : memref<128x128xf32, #tpu.memory_space<vmem>>, vector<128x128xf32>
    %cst_16 = arith.constant dense<0.000000e+00> : vector<8x128xf32>
    %22 = tpu.matmul %20, %21, %cst_16 {dimension_numbers = #tpu.dot_dimension_numbers<[1], [0], [0], [1], [0, 0, 1, 1], [], []>} : vector<8x128xf32>, vector<128x128xf32>, vector<8x128xf32> -> vector<8x128xf32>
    %c0_17 = arith.constant 0 : index
    %c0_18 = arith.constant 0 : index
    %23 = vector.load %arg7[%c0_17, %c0_18] : memref<1x128xf32, #tpu.memory_space<vmem>>, vector<1x128xf32>
    %24 = vector.broadcast %23 : vector<1x128xf32> to vector<8x128xf32>
    %25 = arith.addf %22, %24 : vector<8x128xf32>
    %cst_19 = arith.constant 0.000000e+00 : f32
    %26 = vector.broadcast %cst_19 : f32 to vector<8x128xf32>
    %27 = arith.cmpf ogt, %25, %26 : vector<8x128xf32>
    %cst_20 = arith.constant 2.000000e-01 : f32
    %28 = vector.broadcast %cst_20 : f32 to vector<8x128xf32>
    %29 = arith.mulf %28, %25 : vector<8x128xf32>
    %30 = arith.select %27, %25, %29 : vector<8x128xi1>, vector<8x128xf32>
    %c0_21 = arith.constant 0 : index
    %c0_22 = arith.constant 0 : index
    %31 = vector.load %arg8[%c0_21, %c0_22] : memref<20x128xf32, #tpu.memory_space<vmem>>, vector<20x128xf32>
    %cst_23 = arith.constant dense<0.000000e+00> : vector<8x128xf32>
    %32 = tpu.matmul %0, %31, %cst_23 {dimension_numbers = #tpu.dot_dimension_numbers<[1], [0], [0], [1], [0, 0, 1, 1], [], []>} : vector<8x20xf32>, vector<20x128xf32>, vector<8x128xf32> -> vector<8x128xf32>
    %c0_24 = arith.constant 0 : index
    %c0_25 = arith.constant 0 : index
    %33 = vector.load %arg9[%c0_24, %c0_25] : memref<128x128xf32, #tpu.memory_space<vmem>>, vector<128x128xf32>
    %cst_26 = arith.constant dense<0.000000e+00> : vector<8x128xf32>
    %34 = tpu.matmul %30, %33, %cst_26 {dimension_numbers = #tpu.dot_dimension_numbers<[1], [0], [0], [1], [0, 0, 1, 1], [], []>} : vector<8x128xf32>, vector<128x128xf32>, vector<8x128xf32> -> vector<8x128xf32>
    %35 = arith.addf %32, %34 : vector<8x128xf32>
    %c0_27 = arith.constant 0 : index
    %c0_28 = arith.constant 0 : index
    %36 = vector.load %arg10[%c0_27, %c0_28] : memref<1x128xf32, #tpu.memory_space<vmem>>, vector<1x128xf32>
    %37 = vector.broadcast %36 : vector<1x128xf32> to vector<8x128xf32>
    %38 = arith.addf %35, %37 : vector<8x128xf32>
    %cst_29 = arith.constant 0.000000e+00 : f32
    %39 = vector.broadcast %cst_29 : f32 to vector<8x128xf32>
    %40 = arith.cmpf ogt, %38, %39 : vector<8x128xf32>
    %cst_30 = arith.constant 2.000000e-01 : f32
    %41 = vector.broadcast %cst_30 : f32 to vector<8x128xf32>
    %42 = arith.mulf %41, %38 : vector<8x128xf32>
    %43 = arith.select %40, %38, %42 : vector<8x128xi1>, vector<8x128xf32>
    %c0_31 = arith.constant 0 : index
    %c0_32 = arith.constant 0 : index
    %44 = vector.load %arg11[%c0_31, %c0_32] : memref<128x128xf32, #tpu.memory_space<vmem>>, vector<128x128xf32>
    %cst_33 = arith.constant dense<0.000000e+00> : vector<8x128xf32>
    %45 = tpu.matmul %43, %44, %cst_33 {dimension_numbers = #tpu.dot_dimension_numbers<[1], [0], [0], [1], [0, 0, 1, 1], [], []>} : vector<8x128xf32>, vector<128x128xf32>, vector<8x128xf32> -> vector<8x128xf32>
    %c0_34 = arith.constant 0 : index
    %c0_35 = arith.constant 0 : index
    %46 = vector.load %arg12[%c0_34, %c0_35] : memref<1x128xf32, #tpu.memory_space<vmem>>, vector<1x128xf32>
    %47 = vector.broadcast %46 : vector<1x128xf32> to vector<8x128xf32>
    %48 = arith.addf %45, %47 : vector<8x128xf32>
    %cst_36 = arith.constant 0.000000e+00 : f32
    %49 = vector.broadcast %cst_36 : f32 to vector<8x128xf32>
    %50 = arith.cmpf ogt, %48, %49 : vector<8x128xf32>
    %cst_37 = arith.constant 2.000000e-01 : f32
    %51 = vector.broadcast %cst_37 : f32 to vector<8x128xf32>
    %52 = arith.mulf %51, %48 : vector<8x128xf32>
    %53 = arith.select %50, %48, %52 : vector<8x128xi1>, vector<8x128xf32>
    %c0_38 = arith.constant 0 : index
    %c0_39 = arith.constant 0 : index
    %54 = vector.load %arg13[%c0_38, %c0_39] : memref<128x128xf32, #tpu.memory_space<vmem>>, vector<128x128xf32>
    %cst_40 = arith.constant dense<0.000000e+00> : vector<8x128xf32>
    %55 = tpu.matmul %53, %54, %cst_40 {dimension_numbers = #tpu.dot_dimension_numbers<[1], [0], [0], [1], [0, 0, 1, 1], [], []>} : vector<8x128xf32>, vector<128x128xf32>, vector<8x128xf32> -> vector<8x128xf32>
    %c0_41 = arith.constant 0 : index
    %c0_42 = arith.constant 0 : index
    %56 = vector.load %arg14[%c0_41, %c0_42] : memref<1x128xf32, #tpu.memory_space<vmem>>, vector<1x128xf32>
    %57 = vector.broadcast %56 : vector<1x128xf32> to vector<8x128xf32>
    %58 = arith.addf %55, %57 : vector<8x128xf32>
    %cst_43 = arith.constant 0.000000e+00 : f32
    %59 = vector.broadcast %cst_43 : f32 to vector<8x128xf32>
    %60 = arith.cmpf ogt, %58, %59 : vector<8x128xf32>
    %cst_44 = arith.constant 2.000000e-01 : f32
    %61 = vector.broadcast %cst_44 : f32 to vector<8x128xf32>
    %62 = arith.mulf %61, %58 : vector<8x128xf32>
    %63 = arith.select %60, %58, %62 : vector<8x128xi1>, vector<8x128xf32>
    %c0_45 = arith.constant 0 : index
    %c0_46 = arith.constant 0 : index
    %64 = vector.load %arg15[%c0_45, %c0_46] : memref<128x128xf32, #tpu.memory_space<vmem>>, vector<128x128xf32>
    %cst_47 = arith.constant dense<0.000000e+00> : vector<8x128xf32>
    %65 = tpu.matmul %63, %64, %cst_47 {dimension_numbers = #tpu.dot_dimension_numbers<[1], [0], [0], [1], [0, 0, 1, 1], [], []>} : vector<8x128xf32>, vector<128x128xf32>, vector<8x128xf32> -> vector<8x128xf32>
    %c0_48 = arith.constant 0 : index
    %c0_49 = arith.constant 0 : index
    %66 = vector.load %arg16[%c0_48, %c0_49] : memref<1x128xf32, #tpu.memory_space<vmem>>, vector<1x128xf32>
    %67 = vector.broadcast %66 : vector<1x128xf32> to vector<8x128xf32>
    %68 = arith.addf %65, %67 : vector<8x128xf32>
    %c0_50 = arith.constant 0 : index
    %c0_51 = arith.constant 0 : index
    %69 = vector.load %arg17[%c0_50, %c0_51] : memref<8x128xf32, #tpu.memory_space<vmem>>, vector<8x128xf32>
    tpu.vector_store %arg17[%c0_50, %c0_51], %68 {strides = array<i32>} : memref<8x128xf32, #tpu.memory_space<vmem>>, vector<8x128xf32>,
    return
  }
  func.func @transform_0(%arg0: i32) -> (i32, i32) {
    %c0_i32 = arith.constant 0 : i32
    %c0_i32_0 = arith.constant 0 : i32
    return %arg0, %c0_i32 : i32, i32
  }
  func.func @transform_1(%arg0: i32) -> (i32, i32) {
    %c0_i32 = arith.constant 0 : i32
    %c0_i32_0 = arith.constant 0 : i32
    %c0_i32_1 = arith.constant 0 : i32
    return %c0_i32, %c0_i32_0 : i32, i32
  }
  func.func @transform_2(%arg0: i32) -> (i32, i32) {
    %c0_i32 = arith.constant 0 : i32
    %c0_i32_0 = arith.constant 0 : i32
    %c0_i32_1 = arith.constant 0 : i32
    return %c0_i32, %c0_i32_0 : i32, i32
  }
  func.func @transform_3(%arg0: i32) -> (i32, i32) {
    %c0_i32 = arith.constant 0 : i32
    %c0_i32_0 = arith.constant 0 : i32
    %c0_i32_1 = arith.constant 0 : i32
    return %c0_i32, %c0_i32_0 : i32, i32
  }
  func.func @transform_4(%arg0: i32) -> (i32, i32) {
    %c0_i32 = arith.constant 0 : i32
    %c0_i32_0 = arith.constant 0 : i32
    %c0_i32_1 = arith.constant 0 : i32
    return %c0_i32, %c0_i32_0 : i32, i32
  }
  func.func @transform_5(%arg0: i32) -> (i32, i32) {
    %c0_i32 = arith.constant 0 : i32
    %c0_i32_0 = arith.constant 0 : i32
    %c0_i32_1 = arith.constant 0 : i32
    return %c0_i32, %c0_i32_0 : i32, i32
  }
  func.func @transform_6(%arg0: i32) -> (i32, i32) {
    %c0_i32 = arith.constant 0 : i32
    %c0_i32_0 = arith.constant 0 : i32
    %c0_i32_1 = arith.constant 0 : i32
    return %c0_i32, %c0_i32_0 : i32, i32
  }
  func.func @transform_7(%arg0: i32) -> (i32, i32) {
    %c0_i32 = arith.constant 0 : i32
    %c0_i32_0 = arith.constant 0 : i32
    %c0_i32_1 = arith.constant 0 : i32
    return %c0_i32, %c0_i32_0 : i32, i32
  }
  func.func @transform_8(%arg0: i32) -> (i32, i32) {
    %c0_i32 = arith.constant 0 : i32
    %c0_i32_0 = arith.constant 0 : i32
    %c0_i32_1 = arith.constant 0 : i32
    return %c0_i32, %c0_i32_0 : i32, i32
  }
  func.func @transform_9(%arg0: i32) -> (i32, i32) {
    %c0_i32 = arith.constant 0 : i32
    %c0_i32_0 = arith.constant 0 : i32
    %c0_i32_1 = arith.constant 0 : i32
    return %c0_i32, %c0_i32_0 : i32, i32
  }
  func.func @transform_10(%arg0: i32) -> (i32, i32) {
    %c0_i32 = arith.constant 0 : i32
    %c0_i32_0 = arith.constant 0 : i32
    %c0_i32_1 = arith.constant 0 : i32
    return %c0_i32, %c0_i32_0 : i32, i32
  }
  func.func @transform_11(%arg0: i32) -> (i32, i32) {
    %c0_i32 = arith.constant 0 : i32
    %c0_i32_0 = arith.constant 0 : i32
    %c0_i32_1 = arith.constant 0 : i32
    return %c0_i32, %c0_i32_0 : i32, i32
  }
  func.func @transform_12(%arg0: i32) -> (i32, i32) {
    %c0_i32 = arith.constant 0 : i32
    %c0_i32_0 = arith.constant 0 : i32
    %c0_i32_1 = arith.constant 0 : i32
    return %c0_i32, %c0_i32_0 : i32, i32
  }
  func.func @transform_13(%arg0: i32) -> (i32, i32) {
    %c0_i32 = arith.constant 0 : i32
    %c0_i32_0 = arith.constant 0 : i32
    %c0_i32_1 = arith.constant 0 : i32
    return %c0_i32, %c0_i32_0 : i32, i32
  }
  func.func @transform_14(%arg0: i32) -> (i32, i32) {
    %c0_i32 = arith.constant 0 : i32
    %c0_i32_0 = arith.constant 0 : i32
    %c0_i32_1 = arith.constant 0 : i32
    return %c0_i32, %c0_i32_0 : i32, i32
  }
  func.func @transform_15(%arg0: i32) -> (i32, i32) {
    %c0_i32 = arith.constant 0 : i32
    %c0_i32_0 = arith.constant 0 : i32
    %c0_i32_1 = arith.constant 0 : i32
    return %c0_i32, %c0_i32_0 : i32, i32
  }
  func.func @transform_16(%arg0: i32) -> (i32, i32) {
    %c0_i32 = arith.constant 0 : i32
    %c0_i32_0 = arith.constant 0 : i32
    return %arg0, %c0_i32 : i32, i32
  }
}

</mosaic_0001>

<llo_original>
// kernel: q_forward.1
$region0: #{q_forward.1}
  #allocation0 [shape = 'u32[]', space=smem, size = 0x4, offset = 0x4, fixed_abs, tag = 'smem constant byte address 0x4 - core index']
  #allocation1 [shape = 'u32[144,128]{1,0:T(1,128)}', space=vmem, size = 0x12000, scoped, tag = 'internal scratch']
  %s0 = inlined_call_operand.hbm [shape: f32[8,20], index: 0, kind: input, shape index: {}]
  %s1 = inlined_call_operand.hbm [shape: f32[20,128], index: 1, kind: input, shape index: {}]
  %s2 = inlined_call_operand.hbm [shape: f32[1,128], index: 2, kind: input, shape index: {}]
  %s3 = inlined_call_operand.hbm [shape: f32[128,128], index: 3, kind: input, shape index: {}]
  %s4 = inlined_call_operand.hbm [shape: f32[1,128], index: 4, kind: input, shape index: {}]
  %s5 = inlined_call_operand.hbm [shape: f32[128,128], index: 5, kind: input, shape index: {}]
  %s6 = inlined_call_operand.hbm [shape: f32[1,128], index: 6, kind: input, shape index: {}]
  %s7 = inlined_call_operand.hbm [shape: f32[20,128], index: 7, kind: input, shape index: {}]
  %s8 = inlined_call_operand.hbm [shape: f32[128,128], index: 8, kind: input, shape index: {}]
  %s9 = inlined_call_operand.hbm [shape: f32[1,128], index: 9, kind: input, shape index: {}]
  %s10 = inlined_call_operand.hbm [shape: f32[128,128], index: 10, kind: input, shape index: {}]
  %s11 = inlined_call_operand.hbm [shape: f32[1,128], index: 11, kind: input, shape index: {}]
  %s12 = inlined_call_operand.hbm [shape: f32[128,128], index: 12, kind: input, shape index: {}]
  %s13 = inlined_call_operand.hbm [shape: f32[1,128], index: 13, kind: input, shape index: {}]
  %s14 = inlined_call_operand.hbm [shape: f32[128,128], index: 14, kind: input, shape index: {}]
  %s15 = inlined_call_operand.hbm [shape: f32[1,128], index: 15, kind: input, shape index: {}]
  %s16 = inlined_call_operand.hbm [shape: f32[8,128], index: 16, kind: output, shape index: {}]
  %s17 = sld [smem:[#allocation0]]
  $region138: #{q_forward.1} parent=0
    _
  %s19 = ssub.s32 1, %s17
  %s20 = scalar_select 0, %s19, %s17
  $region1: #{q_forward.1} parent=0
    #allocation2 [shape = 'u8[4096]{0}', space=vmem, size = 0x1000, scoped, tag = 'input window, operand 0, single buffered']
    #allocation3 [shape = 's32[1]{0}', space=sflag, size = 0x4, scoped, tag = 'scoped memory for q_forward.1']
    #allocation4 [shape = 's32[1]{0}', space=sflag, size = 0x4, scoped, tag = 'scoped memory for q_forward.1']
    #allocation5 [shape = 'u8[12288]{0}', space=vmem, size = 0x3000, scoped, tag = 'input window, operand 1, single buffered']
    #allocation6 [shape = 's32[1]{0}', space=sflag, size = 0x4, scoped, tag = 'scoped memory for q_forward.1']
    #allocation7 [shape = 'u8[512]{0}', space=vmem, size = 0x400, scoped, tag = 'input window, operand 2, single buffered']
    #allocation8 [shape = 'u8[65536]{0}', space=vmem, size = 0x10000, scoped, tag = 'input window, operand 3, single buffered']
    #allocation9 [shape = 's32[1]{0}', space=sflag, size = 0x4, scoped, tag = 'scoped memory for q_forward.1']
    #allocation10 [shape = 'u8[512]{0}', space=vmem, size = 0x400, scoped, tag = 'input window, operand 4, single buffered']
    #allocation11 [shape = 'u8[65536]{0}', space=vmem, size = 0x10000, scoped, tag = 'input window, operand 5, single buffered']
    #allocation12 [shape = 's32[1]{0}', space=sflag, size = 0x4, scoped, tag = 'scoped memory for q_forward.1']
    #allocation13 [shape = 'u8[512]{0}', space=vmem, size = 0x400, scoped, tag = 'input window, operand 6, single buffered']
    #allocation14 [shape = 'u8[12288]{0}', space=vmem, size = 0x3000, scoped, tag = 'input window, operand 7, single buffered']
    #allocation15 [shape = 's32[1]{0}', space=sflag, size = 0x4, scoped, tag = 'scoped memory for q_forward.1']
    #allocation16 [shape = 'u8[65536]{0}', space=vmem, size = 0x10000, scoped, tag = 'input window, operand 8, single buffered']
    #allocation17 [shape = 'u8[512]{0}', space=vmem, size = 0x400, scoped, tag = 'input window, operand 9, single buffered']
    #allocation18 [shape = 's32[1]{0}', space=sflag, size = 0x4, scoped, tag = 'scoped memory for q_forward.1']
    #allocation19 [shape = 'u8[65536]{0}', space=vmem, size = 0x10000, scoped, tag = 'input window, operand 10, single buffered']
    #allocation20 [shape = 'u8[512]{0}', space=vmem, size = 0x400, scoped, tag = 'input window, operand 11, single buffered']
    #allocation21 [shape = 's32[1]{0}', space=sflag, size = 0x4, scoped, tag = 'scoped memory for q_forward.1']
    #allocation22 [shape = 'u8[65536]{0}', space=vmem, size = 0x10000, scoped, tag = 'input window, operand 12, single buffered']
    #allocation23 [shape = 'u8[512]{0}', space=vmem, size = 0x400, scoped, tag = 'input window, operand 13, single buffered']
    #allocation24 [shape = 's32[1]{0}', space=sflag, size = 0x4, scoped, tag = 'scoped memory for q_forward.1']
    #allocation25 [shape = 'u8[65536]{0}', space=vmem, size = 0x10000, scoped, tag = 'input window, operand 14, single buffered']
    #allocation26 [shape = 'u8[512]{0}', space=vmem, size = 0x400, scoped, tag = 'input window, operand 15, single buffered']
    #allocation27 [shape = 's32[1]{0}', space=sflag, size = 0x4, scoped, tag = 'scoped memory for q_forward.1']
    #allocation28 [shape = 'u8[4096]{0}', space=vmem, size = 0x1000, scoped, tag = 'output window, operand 0, single buffered']
    %21 = vsyncpa [#allocation3], 0
    %22 = vsyncpa [#allocation6], 0
    %23 = vsyncpa [#allocation9], 0
    %24 = vsyncpa [#allocation12], 0
    %25 = vsyncpa [#allocation15], 0
    %26 = vsyncpa [#allocation18], 0
    %27 = vsyncpa [#allocation21], 0
    %28 = vsyncpa [#allocation24], 0
    %29 = vsyncpa [#allocation27], 0
    %30 = vsyncpa [#allocation4], 0
    // Predicated region
    $region2: #{q_forward.1} parent=1 // pred_check
      _
    $region3: #{q_forward.1} parent=1 // pred_check_branch
      %32 = sbr.rel (0) target = $region5
    $region4: #{q_forward.1} parent=1 // pred_region
      %s34 = ssub.s32 128, 128
      %35 = vsyncadd [#allocation3], %s34
      %s37 = sshll.u32 [#allocation2], 4
      %s38 = int_to_ptr.vmem [resolvable:$true] %s37
      %40 = dma.hbm_to_vmem [thread:$0]  %s0, 128, %s38, [#allocation3]
    $region5: #{q_forward.1} parent=1 // pred_fallthru
      _
    // Predicated region
    $region6: #{q_forward.1} parent=1 // pred_check
      _
    $region7: #{q_forward.1} parent=1 // pred_check_branch
      %42 = sbr.rel (0) target = $region9
    $region8: #{q_forward.1} parent=1 // pred_region
      %s44 = ssub.s32 384, 384
      %45 = vsyncadd [#allocation6], %s44
      %s46 = sshll.u32 [#allocation5], 4
      %s47 = int_to_ptr.vmem [resolvable:$true] %s46
      %52 = dma.hbm_to_vmem [thread:$0]  %s1, 384, %s47, [#allocation6], 128, 128, 8
    $region9: #{q_forward.1} parent=1 // pred_fallthru
      _
    // Predicated region
    $region10: #{q_forward.1} parent=1 // pred_check
      _
    $region11: #{q_forward.1} parent=1 // pred_check_branch
      %54 = sbr.rel (0) target = $region13
    $region12: #{q_forward.1} parent=1 // pred_region
      %s56 = ssub.s32 16, 16
      %57 = vsyncadd [#allocation6], %s56
      %s59 = sshll.u32 [#allocation7], 4
      %s60 = int_to_ptr.vmem [resolvable:$true] %s59
      %62 = dma.hbm_to_vmem [thread:$0]  %s2, 16, %s60, [#allocation6]
    $region13: #{q_forward.1} parent=1 // pred_fallthru
      _
    // Predicated region
    $region14: #{q_forward.1} parent=1 // pred_check
      _
    $region15: #{q_forward.1} parent=1 // pred_check_branch
      %64 = sbr.rel (0) target = $region17
    $region16: #{q_forward.1} parent=1 // pred_region
      %s66 = ssub.s32 2048, 2048
      %67 = vsyncadd [#allocation9], %s66
      %s68 = sshll.u32 [#allocation8], 4
      %s69 = int_to_ptr.vmem [resolvable:$true] %s68
      %74 = dma.hbm_to_vmem [thread:$0]  %s3, 2048, %s69, [#allocation9], 128, 128, 8
    $region17: #{q_forward.1} parent=1 // pred_fallthru
      _
    // Predicated region
    $region18: #{q_forward.1} parent=1 // pred_check
      _
    $region19: #{q_forward.1} parent=1 // pred_check_branch
      %76 = sbr.rel (0) target = $region21
    $region20: #{q_forward.1} parent=1 // pred_region
      %s78 = ssub.s32 16, 16
      %79 = vsyncadd [#allocation9], %s78
      %s81 = sshll.u32 [#allocation10], 4
      %s82 = int_to_ptr.vmem [resolvable:$true] %s81
      %84 = dma.hbm_to_vmem [thread:$0]  %s4, 16, %s82, [#allocation9]
    $region21: #{q_forward.1} parent=1 // pred_fallthru
      _
    // Predicated region
    $region22: #{q_forward.1} parent=1 // pred_check
      _
    $region23: #{q_forward.1} parent=1 // pred_check_branch
      %86 = sbr.rel (0) target = $region25
    $region24: #{q_forward.1} parent=1 // pred_region
      %s88 = ssub.s32 2048, 2048
      %89 = vsyncadd [#allocation12], %s88
      %s90 = sshll.u32 [#allocation11], 4
      %s91 = int_to_ptr.vmem [resolvable:$true] %s90
      %96 = dma.hbm_to_vmem [thread:$0]  %s5, 2048, %s91, [#allocation12], 128, 128, 8
    $region25: #{q_forward.1} parent=1 // pred_fallthru
      _
    // Predicated region
    $region26: #{q_forward.1} parent=1 // pred_check
      _
    $region27: #{q_forward.1} parent=1 // pred_check_branch
      %98 = sbr.rel (0) target = $region29
    $region28: #{q_forward.1} parent=1 // pred_region
      %s100 = ssub.s32 16, 16
      %101 = vsyncadd [#allocation12], %s100
      %s103 = sshll.u32 [#allocation13], 4
      %s104 = int_to_ptr.vmem [resolvable:$true] %s103
      %106 = dma.hbm_to_vmem [thread:$0]  %s6, 16, %s104, [#allocation12]
    $region29: #{q_forward.1} parent=1 // pred_fallthru
      _
    // Predicated region
    $region30: #{q_forward.1} parent=1 // pred_check
      _
    $region31: #{q_forward.1} parent=1 // pred_check_branch
      %108 = sbr.rel (0) target = $region33
    $region32: #{q_forward.1} parent=1 // pred_region
      %s110 = ssub.s32 384, 384
      %111 = vsyncadd [#allocation15], %s110
      %s112 = sshll.u32 [#allocation14], 4
      %s113 = int_to_ptr.vmem [resolvable:$true] %s112
      %118 = dma.hbm_to_vmem [thread:$0]  %s7, 384, %s113, [#allocation15], 128, 128, 8
    $region33: #{q_forward.1} parent=1 // pred_fallthru
      _
    // Predicated region
    $region34: #{q_forward.1} parent=1 // pred_check
      _
    $region35: #{q_forward.1} parent=1 // pred_check_branch
      %120 = sbr.rel (0) target = $region37
    $region36: #{q_forward.1} parent=1 // pred_region
      %s122 = ssub.s32 2048, 2048
      %123 = vsyncadd [#allocation15], %s122
      %s124 = sshll.u32 [#allocation16], 4
      %s125 = int_to_ptr.vmem [resolvable:$true] %s124
      %130 = dma.hbm_to_vmem [thread:$0]  %s8, 2048, %s125, [#allocation15], 128, 128, 8
    $region37: #{q_forward.1} parent=1 // pred_fallthru
      _
    // Predicated region
    $region38: #{q_forward.1} parent=1 // pred_check
      _
    $region39: #{q_forward.1} parent=1 // pred_check_branch
      %132 = sbr.rel (0) target = $region41
    $region40: #{q_forward.1} parent=1 // pred_region
      %s134 = ssub.s32 16, 16
      %135 = vsyncadd [#allocation18], %s134
      %s137 = sshll.u32 [#allocation17], 4
      %s138 = int_to_ptr.vmem [resolvable:$true] %s137
      %140 = dma.hbm_to_vmem [thread:$0]  %s9, 16, %s138, [#allocation18]
    $region41: #{q_forward.1} parent=1 // pred_fallthru
      _
    // Predicated region
    $region42: #{q_forward.1} parent=1 // pred_check
      _
    $region43: #{q_forward.1} parent=1 // pred_check_branch
      %142 = sbr.rel (0) target = $region45
    $region44: #{q_forward.1} parent=1 // pred_region
      %s144 = ssub.s32 2048, 2048
      %145 = vsyncadd [#allocation18], %s144
      %s146 = sshll.u32 [#allocation19], 4
      %s147 = int_to_ptr.vmem [resolvable:$true] %s146
      %152 = dma.hbm_to_vmem [thread:$0]  %s10, 2048, %s147, [#allocation18], 128, 128, 8
    $region45: #{q_forward.1} parent=1 // pred_fallthru
      _
    // Predicated region
    $region46: #{q_forward.1} parent=1 // pred_check
      _
    $region47: #{q_forward.1} parent=1 // pred_check_branch
      %154 = sbr.rel (0) target = $region49
    $region48: #{q_forward.1} parent=1 // pred_region
      %s156 = ssub.s32 16, 16
      %157 = vsyncadd [#allocation21], %s156
      %s159 = sshll.u32 [#allocation20], 4
      %s160 = int_to_ptr.vmem [resolvable:$true] %s159
      %162 = dma.hbm_to_vmem [thread:$0]  %s11, 16, %s160, [#allocation21]
    $region49: #{q_forward.1} parent=1 // pred_fallthru
      _
    // Predicated region
    $region50: #{q_forward.1} parent=1 // pred_check
      _
    $region51: #{q_forward.1} parent=1 // pred_check_branch
      %164 = sbr.rel (0) target = $region53
    $region52: #{q_forward.1} parent=1 // pred_region
      %s166 = ssub.s32 2048, 2048
      %167 = vsyncadd [#allocation21], %s166
      %s168 = sshll.u32 [#allocation22], 4
      %s169 = int_to_ptr.vmem [resolvable:$true] %s168
      %174 = dma.hbm_to_vmem [thread:$0]  %s12, 2048, %s169, [#allocation21], 128, 128, 8
    $region53: #{q_forward.1} parent=1 // pred_fallthru
      _
    // Predicated region
    $region54: #{q_forward.1} parent=1 // pred_check
      _
    $region55: #{q_forward.1} parent=1 // pred_check_branch
      %176 = sbr.rel (0) target = $region57
    $region56: #{q_forward.1} parent=1 // pred_region
      %s178 = ssub.s32 16, 16
      %179 = vsyncadd [#allocation24], %s178
      %s181 = sshll.u32 [#allocation23], 4
      %s182 = int_to_ptr.vmem [resolvable:$true] %s181
      %184 = dma.hbm_to_vmem [thread:$0]  %s13, 16, %s182, [#allocation24]
    $region57: #{q_forward.1} parent=1 // pred_fallthru
      _
    // Predicated region
    $region58: #{q_forward.1} parent=1 // pred_check
      _
    $region59: #{q_forward.1} parent=1 // pred_check_branch
      %186 = sbr.rel (0) target = $region61
    $region60: #{q_forward.1} parent=1 // pred_region
      %s188 = ssub.s32 2048, 2048
      %189 = vsyncadd [#allocation24], %s188
      %s190 = sshll.u32 [#allocation25], 4
      %s191 = int_to_ptr.vmem [resolvable:$true] %s190
      %196 = dma.hbm_to_vmem [thread:$0]  %s14, 2048, %s191, [#allocation24], 128, 128, 8
    $region61: #{q_forward.1} parent=1 // pred_fallthru
      _
    // Predicated region
    $region62: #{q_forward.1} parent=1 // pred_check
      _
    $region63: #{q_forward.1} parent=1 // pred_check_branch
      %198 = sbr.rel (0) target = $region65
    $region64: #{q_forward.1} parent=1 // pred_region
      %s200 = ssub.s32 16, 16
      %201 = vsyncadd [#allocation27], %s200
      %s203 = sshll.u32 [#allocation26], 4
      %s204 = int_to_ptr.vmem [resolvable:$true] %s203
      %206 = dma.hbm_to_vmem [thread:$0]  %s15, 16, %s204, [#allocation27]
    $region65: #{q_forward.1} parent=1 // pred_fallthru
      _
    // Predicated region
    $region66: #{q_forward.1} parent=1 // pred_check
      _
    $region67: #{q_forward.1} parent=1 // pred_check_branch
      %208 = sbr.rel (0) target = $region69
    $region68: #{q_forward.1} parent=1 // pred_region
      %209 = dma.done [#allocation3], 128
    $region69: #{q_forward.1} parent=1 // pred_fallthru
      _
    // Predicated region
    $region70: #{q_forward.1} parent=1 // pred_check
      _
    $region71: #{q_forward.1} parent=1 // pred_check_branch
      %211 = sbr.rel (0) target = $region73
    $region72: #{q_forward.1} parent=1 // pred_region
      %212 = dma.done [#allocation6], 384
    $region73: #{q_forward.1} parent=1 // pred_fallthru
      _
    // Predicated region
    $region74: #{q_forward.1} parent=1 // pred_check
      _
    $region75: #{q_forward.1} parent=1 // pred_check_branch
      %214 = sbr.rel (0) target = $region77
    $region76: #{q_forward.1} parent=1 // pred_region
      %215 = dma.done [#allocation6], 16
    $region77: #{q_forward.1} parent=1 // pred_fallthru
      _
    // Predicated region
    $region78: #{q_forward.1} parent=1 // pred_check
      _
    $region79: #{q_forward.1} parent=1 // pred_check_branch
      %217 = sbr.rel (0) target = $region81
    $region80: #{q_forward.1} parent=1 // pred_region
      %218 = dma.done [#allocation9], 2048
    $region81: #{q_forward.1} parent=1 // pred_fallthru
      _
    // Predicated region
    $region82: #{q_forward.1} parent=1 // pred_check
      _
    $region83: #{q_forward.1} parent=1 // pred_check_branch
      %220 = sbr.rel (0) target = $region85
    $region84: #{q_forward.1} parent=1 // pred_region
      %221 = dma.done [#allocation9], 16
    $region85: #{q_forward.1} parent=1 // pred_fallthru
      _
    // Predicated region
    $region86: #{q_forward.1} parent=1 // pred_check
      _
    $region87: #{q_forward.1} parent=1 // pred_check_branch
      %223 = sbr.rel (0) target = $region89
    $region88: #{q_forward.1} parent=1 // pred_region
      %224 = dma.done [#allocation12], 2048
    $region89: #{q_forward.1} parent=1 // pred_fallthru
      _
    // Predicated region
    $region90: #{q_forward.1} parent=1 // pred_check
      _
    $region91: #{q_forward.1} parent=1 // pred_check_branch
      %226 = sbr.rel (0) target = $region93
    $region92: #{q_forward.1} parent=1 // pred_region
      %227 = dma.done [#allocation12], 16
    $region93: #{q_forward.1} parent=1 // pred_fallthru
      _
    // Predicated region
    $region94: #{q_forward.1} parent=1 // pred_check
      _
    $region95: #{q_forward.1} parent=1 // pred_check_branch
      %229 = sbr.rel (0) target = $region97
    $region96: #{q_forward.1} parent=1 // pred_region
      %230 = dma.done [#allocation15], 384
    $region97: #{q_forward.1} parent=1 // pred_fallthru
      _
    // Predicated region
    $region98: #{q_forward.1} parent=1 // pred_check
      _
    $region99: #{q_forward.1} parent=1 // pred_check_branch
      %232 = sbr.rel (0) target = $region101
    $region100: #{q_forward.1} parent=1 // pred_region
      %233 = dma.done [#allocation15], 2048
    $region101: #{q_forward.1} parent=1 // pred_fallthru
      _
    // Predicated region
    $region102: #{q_forward.1} parent=1 // pred_check
      _
    $region103: #{q_forward.1} parent=1 // pred_check_branch
      %235 = sbr.rel (0) target = $region105
    $region104: #{q_forward.1} parent=1 // pred_region
      %236 = dma.done [#allocation18], 16
    $region105: #{q_forward.1} parent=1 // pred_fallthru
      _
    // Predicated region
    $region106: #{q_forward.1} parent=1 // pred_check
      _
    $region107: #{q_forward.1} parent=1 // pred_check_branch
      %238 = sbr.rel (0) target = $region109
    $region108: #{q_forward.1} parent=1 // pred_region
      %239 = dma.done [#allocation18], 2048
    $region109: #{q_forward.1} parent=1 // pred_fallthru
      _
    // Predicated region
    $region110: #{q_forward.1} parent=1 // pred_check
      _
    $region111: #{q_forward.1} parent=1 // pred_check_branch
      %241 = sbr.rel (0) target = $region113
    $region112: #{q_forward.1} parent=1 // pred_region
      %242 = dma.done [#allocation21], 16
    $region113: #{q_forward.1} parent=1 // pred_fallthru
      _
    // Predicated region
    $region114: #{q_forward.1} parent=1 // pred_check
      _
    $region115: #{q_forward.1} parent=1 // pred_check_branch
      %244 = sbr.rel (0) target = $region117
    $region116: #{q_forward.1} parent=1 // pred_region
      %245 = dma.done [#allocation21], 2048
    $region117: #{q_forward.1} parent=1 // pred_fallthru
      _
    // Predicated region
    $region118: #{q_forward.1} parent=1 // pred_check
      _
    $region119: #{q_forward.1} parent=1 // pred_check_branch
      %247 = sbr.rel (0) target = $region121
    $region120: #{q_forward.1} parent=1 // pred_region
      %248 = dma.done [#allocation24], 16
    $region121: #{q_forward.1} parent=1 // pred_fallthru
      _
    // Predicated region
    $region122: #{q_forward.1} parent=1 // pred_check
      _
    $region123: #{q_forward.1} parent=1 // pred_check_branch
      %250 = sbr.rel (0) target = $region125
    $region124: #{q_forward.1} parent=1 // pred_region
      %251 = dma.done [#allocation24], 2048
    $region125: #{q_forward.1} parent=1 // pred_fallthru
      _
    // Predicated region
    $region126: #{q_forward.1} parent=1 // pred_check
      _
    $region127: #{q_forward.1} parent=1 // pred_check_branch
      %253 = sbr.rel (0) target = $region129
    $region128: #{q_forward.1} parent=1 // pred_region
      %254 = dma.done [#allocation27], 16
    $region129: #{q_forward.1} parent=1 // pred_fallthru
      _
    %v255 = vld [vmem:[#allocation2] sm:$0xff]
    %v256 = vld [vmem:[#allocation5] sm:$0xff]
    %v257 = vld [vmem:[#allocation5 + $0x8] sm:$0xff]
    %v258 = vld [vmem:[#allocation5 + $0x10] sm:$0xf]
    %v259 = vld [vmem:[#allocation7] sm:$0x1]
    %v261 = vlaneseq
    %v262 = vshrl.u32 %v261, 7
    %v263 = vsub.s32 0, %v262
    %v264 = vrot.slane %v259, %v263
    %vm266 = vcmask 162816
    %v268 = vsel %vm266, %v255, 0
    %vm270 = vcmask 1043456
    %v272 = vsel %vm270, %v258, 0
    %274 = vmatprep.subr.mxu0 0.0
    %275 = vmatpush1.msra.mxu0 %v256
    %276 = vmatprep.subr.mxu0 0.0
    %277 = vmatpush1.msra.mxu0 %v257
    %278 = vmatprep.subr.mxu0 0.0
    %279 = vmatpush1.msra.mxu0 %v272
    %280 = vmatprep.subr.mxu0 0.0
    %281 = vmatpush1.msra.mxu0 0.0
    %282 = vmatprep.subr.mxu0 0.0
    %283 = vmatpush1.msra.mxu0 0.0
    %284 = vmatprep.subr.mxu0 0.0
    %285 = vmatpush1.msra.mxu0 0.0
    %286 = vmatprep.subr.mxu0 0.0
    %287 = vmatpush1.msra.mxu0 0.0
    %288 = vmatprep.subr.mxu0 0.0
    %289 = vmatpush1.msra.mxu0 0.0
    %290 = vmatprep.subr.mxu0 0.0
    %291 = vmatpush1.msra.mxu0 0.0
    %292 = vmatprep.subr.mxu0 0.0
    %293 = vmatpush1.msra.mxu0 0.0
    %294 = vmatprep.subr.mxu0 0.0
    %295 = vmatpush1.msra.mxu0 0.0
    %296 = vmatprep.subr.mxu0 0.0
    %297 = vmatpush1.msra.mxu0 0.0
    %298 = vmatprep.subr.mxu0 0.0
    %299 = vmatpush1.msra.mxu0 0.0
    %300 = vmatprep.subr.mxu0 0.0
    %301 = vmatpush1.msra.mxu0 0.0
    %302 = vmatprep.subr.mxu0 0.0
    %303 = vmatpush1.msra.mxu0 0.0
    %304 = vmatprep.subr.mxu0 0.0
    %305 = vmatpush1.msra.mxu0 0.0
    %306 = vmatprep.subr.mxu0 0.0
    %307 = vmatpush1.msra.mxu0 0.0
    %308 = vmatprep.subr.mxu0 0.0
    %309 = vmatpush1.msra.mxu0 0.0
    %310 = vmatprep.subr.mxu0 0.0
    %311 = vmatpush1.msra.mxu0 0.0
    %312 = vmatprep.subr.mxu0 0.0
    %313 = vmatpush1.msra.mxu0 0.0
    %314 = vmatprep.subr.mxu0 0.0
    %315 = vmatpush1.msra.mxu0 0.0
    %316 = vmatprep.subr.mxu0 0.0
    %317 = vmatpush1.msra.mxu0 0.0
    %318 = vmatprep.subr.mxu0 0.0
    %319 = vmatpush1.msra.mxu0 0.0
    %320 = vmatprep.subr.mxu0 0.0
    %321 = vmatpush1.msra.mxu0 0.0
    %322 = vmatprep.subr.mxu0 0.0
    %323 = vmatpush1.msra.mxu0 0.0
    %324 = vmatprep.subr.mxu0 0.0
    %325 = vmatpush1.msra.mxu0 0.0
    %326 = vmatprep.subr.mxu0 0.0
    %327 = vmatpush1.msra.mxu0 0.0
    %328 = vmatprep.subr.mxu0 0.0
    %329 = vmatpush1.msra.mxu0 0.0
    %330 = vmatprep.subr.mxu0 0.0
    %331 = vmatpush1.msra.mxu0 0.0
    %332 = vmatprep.subr.mxu0 0.0
    %333 = vmatpush1.msra.mxu0 0.0
    %334 = vmatprep.subr.mxu0 0.0
    %335 = vmatpush1.msra.mxu0 0.0
    %336 = vmatprep.subr.mxu0 0.0
    %337 = vmatpush1.msra.mxu0 0.0
    %338 = vmatprep.mubr.f32.mxu0 0.0
    %339 = vmatmul.mubr.f32.gmra.mrb[0].mxu0 %v268
    %v340 = vpop.f32.mrb[0].mxu0
    %v341 = vadd.f32 %v264, %v340
    %v342 = vpop.f32.mrb[0].mxu0
    %343 = vdwg.mxu0
    %vm344 = vcmp.gt.f32.partialorder %v341, 0.0
    %v345 = vmul.f32 %v341, 0.2
    %v346 = vsel %vm344, %v341, %v345
    %v347 = vld [vmem:[#allocation8] sm:$0xff]
    %v348 = vld [vmem:[#allocation8 + $0x8] sm:$0xff]
    %v349 = vld [vmem:[#allocation8 + $0x10] sm:$0xff]
    %v350 = vld [vmem:[#allocation8 + $0x18] sm:$0xff]
    %v351 = vld [vmem:[#allocation8 + $0x20] sm:$0xff]
    %v352 = vld [vmem:[#allocation8 + $0x28] sm:$0xff]
    %v353 = vld [vmem:[#allocation8 + $0x30] sm:$0xff]
    %v354 = vld [vmem:[#allocation8 + $0x38] sm:$0xff]
    %v355 = vld [vmem:[#allocation8 + $0x40] sm:$0xff]
    %v356 = vld [vmem:[#allocation8 + $0x48] sm:$0xff]
    %v357 = vld [vmem:[#allocation8 + $0x50] sm:$0xff]
    %v358 = vld [vmem:[#allocation8 + $0x58] sm:$0xff]
    %v359 = vld [vmem:[#allocation8 + $0x60] sm:$0xff]
    %v360 = vld [vmem:[#allocation8 + $0x68] sm:$0xff]
    %v361 = vld [vmem:[#allocation8 + $0x70] sm:$0xff]
    %v362 = vld [vmem:[#allocation8 + $0x78] sm:$0xff]
    %v363 = vld [vmem:[#allocation10] sm:$0x1]
    %v365 = vlaneseq
    %v366 = vshrl.u32 %v365, 7
    %v367 = vsub.s32 0, %v366
    %v368 = vrot.slane %v363, %v367
    %370 = vmatprep.subr.mxu0 0.0
    %371 = vmatpush1.msra.mxu0 %v347
    %372 = vmatprep.subr.mxu0 0.0
    %373 = vmatpush1.msra.mxu0 %v348
    %374 = vmatprep.subr.mxu0 0.0
    %375 = vmatpush1.msra.mxu0 %v349
    %376 = vmatprep.subr.mxu0 0.0
    %377 = vmatpush1.msra.mxu0 %v350
    %378 = vmatprep.subr.mxu0 0.0
    %379 = vmatpush1.msra.mxu0 %v351
    %380 = vmatprep.subr.mxu0 0.0
    %381 = vmatpush1.msra.mxu0 %v352
    %382 = vmatprep.subr.mxu0 0.0
    %383 = vmatpush1.msra.mxu0 %v353
    %384 = vmatprep.subr.mxu0 0.0
    %385 = vmatpush1.msra.mxu0 %v354
    %386 = vmatprep.subr.mxu0 0.0
    %387 = vmatpush1.msra.mxu0 %v355
    %388 = vmatprep.subr.mxu0 0.0
    %389 = vmatpush1.msra.mxu0 %v356
    %390 = vmatprep.subr.mxu0 0.0
    %391 = vmatpush1.msra.mxu0 %v357
    %392 = vmatprep.subr.mxu0 0.0
    %393 = vmatpush1.msra.mxu0 %v358
    %394 = vmatprep.subr.mxu0 0.0
    %395 = vmatpush1.msra.mxu0 %v359
    %396 = vmatprep.subr.mxu0 0.0
    %397 = vmatpush1.msra.mxu0 %v360
    %398 = vmatprep.subr.mxu0 0.0
    %399 = vmatpush1.msra.mxu0 %v361
    %400 = vmatprep.subr.mxu0 0.0
    %401 = vmatpush1.msra.mxu0 %v362
    %402 = vmatprep.subr.mxu0 0.0
    %403 = vmatpush1.msra.mxu0 0.0
    %404 = vmatprep.subr.mxu0 0.0
    %405 = vmatpush1.msra.mxu0 0.0
    %406 = vmatprep.subr.mxu0 0.0
    %407 = vmatpush1.msra.mxu0 0.0
    %408 = vmatprep.subr.mxu0 0.0
    %409 = vmatpush1.msra.mxu0 0.0
    %410 = vmatprep.subr.mxu0 0.0
    %411 = vmatpush1.msra.mxu0 0.0
    %412 = vmatprep.subr.mxu0 0.0
    %413 = vmatpush1.msra.mxu0 0.0
    %414 = vmatprep.subr.mxu0 0.0
    %415 = vmatpush1.msra.mxu0 0.0
    %416 = vmatprep.subr.mxu0 0.0
    %417 = vmatpush1.msra.mxu0 0.0
    %418 = vmatprep.subr.mxu0 0.0
    %419 = vmatpush1.msra.mxu0 0.0
    %420 = vmatprep.subr.mxu0 0.0
    %421 = vmatpush1.msra.mxu0 0.0
    %422 = vmatprep.subr.mxu0 0.0
    %423 = vmatpush1.msra.mxu0 0.0
    %424 = vmatprep.subr.mxu0 0.0
    %425 = vmatpush1.msra.mxu0 0.0
    %426 = vmatprep.subr.mxu0 0.0
    %427 = vmatpush1.msra.mxu0 0.0
    %428 = vmatprep.subr.mxu0 0.0
    %429 = vmatpush1.msra.mxu0 0.0
    %430 = vmatprep.subr.mxu0 0.0
    %431 = vmatpush1.msra.mxu0 0.0
    %432 = vmatprep.subr.mxu0 0.0
    %433 = vmatpush1.msra.mxu0 0.0
    %434 = vmatprep.mubr.f32.mxu0 0.0
    %435 = vmatmul.mubr.f32.gmra.mrb[0].mxu0 %v346
    %v436 = vpop.f32.mrb[0].mxu0
    %v437 = vadd.f32 %v368, %v436
    %v438 = vpop.f32.mrb[0].mxu0
    %439 = vdwg.mxu0
    %vm440 = vcmp.gt.f32.partialorder %v437, 0.0
    %v441 = vmul.f32 %v437, 0.2
    %v442 = vsel %vm440, %v437, %v441
    %v443 = vld [vmem:[#allocation11] sm:$0xff]
    %v444 = vld [vmem:[#allocation11 + $0x8] sm:$0xff]
    %v445 = vld [vmem:[#allocation11 + $0x10] sm:$0xff]
    %v446 = vld [vmem:[#allocation11 + $0x18] sm:$0xff]
    %v447 = vld [vmem:[#allocation11 + $0x20] sm:$0xff]
    %v448 = vld [vmem:[#allocation11 + $0x28] sm:$0xff]
    %v449 = vld [vmem:[#allocation11 + $0x30] sm:$0xff]
    %v450 = vld [vmem:[#allocation11 + $0x38] sm:$0xff]
    %v451 = vld [vmem:[#allocation11 + $0x40] sm:$0xff]
    %v452 = vld [vmem:[#allocation11 + $0x48] sm:$0xff]
    %v453 = vld [vmem:[#allocation11 + $0x50] sm:$0xff]
    %v454 = vld [vmem:[#allocation11 + $0x58] sm:$0xff]
    %v455 = vld [vmem:[#allocation11 + $0x60] sm:$0xff]
    %v456 = vld [vmem:[#allocation11 + $0x68] sm:$0xff]
    %v457 = vld [vmem:[#allocation11 + $0x70] sm:$0xff]
    %v458 = vld [vmem:[#allocation11 + $0x78] sm:$0xff]
    %v459 = vld [vmem:[#allocation13] sm:$0x1]
    %v461 = vlaneseq
    %v462 = vshrl.u32 %v461, 7
    %v463 = vsub.s32 0, %v462
    %v464 = vrot.slane %v459, %v463
    %466 = vmatprep.subr.mxu0 0.0
    %467 = vmatpush1.msra.mxu0 %v443
    %468 = vmatprep.subr.mxu0 0.0
    %469 = vmatpush1.msra.mxu0 %v444
    %470 = vmatprep.subr.mxu0 0.0
    %471 = vmatpush1.msra.mxu0 %v445
    %472 = vmatprep.subr.mxu0 0.0
    %473 = vmatpush1.msra.mxu0 %v446
    %474 = vmatprep.subr.mxu0 0.0
    %475 = vmatpush1.msra.mxu0 %v447
    %476 = vmatprep.subr.mxu0 0.0
    %477 = vmatpush1.msra.mxu0 %v448
    %478 = vmatprep.subr.mxu0 0.0
    %479 = vmatpush1.msra.mxu0 %v449
    %480 = vmatprep.subr.mxu0 0.0
    %481 = vmatpush1.msra.mxu0 %v450
    %482 = vmatprep.subr.mxu0 0.0
    %483 = vmatpush1.msra.mxu0 %v451
    %484 = vmatprep.subr.mxu0 0.0
    %485 = vmatpush1.msra.mxu0 %v452
    %486 = vmatprep.subr.mxu0 0.0
    %487 = vmatpush1.msra.mxu0 %v453
    %488 = vmatprep.subr.mxu0 0.0
    %489 = vmatpush1.msra.mxu0 %v454
    %490 = vmatprep.subr.mxu0 0.0
    %491 = vmatpush1.msra.mxu0 %v455
    %492 = vmatprep.subr.mxu0 0.0
    %493 = vmatpush1.msra.mxu0 %v456
    %494 = vmatprep.subr.mxu0 0.0
    %495 = vmatpush1.msra.mxu0 %v457
    %496 = vmatprep.subr.mxu0 0.0
    %497 = vmatpush1.msra.mxu0 %v458
    %498 = vmatprep.subr.mxu0 0.0
    %499 = vmatpush1.msra.mxu0 0.0
    %500 = vmatprep.subr.mxu0 0.0
    %501 = vmatpush1.msra.mxu0 0.0
    %502 = vmatprep.subr.mxu0 0.0
    %503 = vmatpush1.msra.mxu0 0.0
    %504 = vmatprep.subr.mxu0 0.0
    %505 = vmatpush1.msra.mxu0 0.0
    %506 = vmatprep.subr.mxu0 0.0
    %507 = vmatpush1.msra.mxu0 0.0
    %508 = vmatprep.subr.mxu0 0.0
    %509 = vmatpush1.msra.mxu0 0.0
    %510 = vmatprep.subr.mxu0 0.0
    %511 = vmatpush1.msra.mxu0 0.0
    %512 = vmatprep.subr.mxu0 0.0
    %513 = vmatpush1.msra.mxu0 0.0
    %514 = vmatprep.subr.mxu0 0.0
    %515 = vmatpush1.msra.mxu0 0.0
    %516 = vmatprep.subr.mxu0 0.0
    %517 = vmatpush1.msra.mxu0 0.0
    %518 = vmatprep.subr.mxu0 0.0
    %519 = vmatpush1.msra.mxu0 0.0
    %520 = vmatprep.subr.mxu0 0.0
    %521 = vmatpush1.msra.mxu0 0.0
    %522 = vmatprep.subr.mxu0 0.0
    %523 = vmatpush1.msra.mxu0 0.0
    %524 = vmatprep.subr.mxu0 0.0
    %525 = vmatpush1.msra.mxu0 0.0
    %526 = vmatprep.subr.mxu0 0.0
    %527 = vmatpush1.msra.mxu0 0.0
    %528 = vmatprep.subr.mxu0 0.0
    %529 = vmatpush1.msra.mxu0 0.0
    %530 = vmatprep.mubr.f32.mxu0 0.0
    %531 = vmatmul.mubr.f32.gmra.mrb[0].mxu0 %v442
    %v532 = vpop.f32.mrb[0].mxu0
    %v533 = vadd.f32 %v464, %v532
    %v534 = vpop.f32.mrb[0].mxu0
    %535 = vdwg.mxu0
    %vm536 = vcmp.gt.f32.partialorder %v533, 0.0
    %v537 = vmul.f32 %v533, 0.2
    %v538 = vsel %vm536, %v533, %v537
    %v539 = vld [vmem:[#allocation14] sm:$0xff]
    %v540 = vld [vmem:[#allocation14 + $0x8] sm:$0xff]
    %v541 = vld [vmem:[#allocation14 + $0x10] sm:$0xf]
    %v542 = vld [vmem:[#allocation16] sm:$0xff]
    %v543 = vld [vmem:[#allocation16 + $0x8] sm:$0xff]
    %v544 = vld [vmem:[#allocation16 + $0x10] sm:$0xff]
    %v545 = vld [vmem:[#allocation16 + $0x18] sm:$0xff]
    %v546 = vld [vmem:[#allocation16 + $0x20] sm:$0xff]
    %v547 = vld [vmem:[#allocation16 + $0x28] sm:$0xff]
    %v548 = vld [vmem:[#allocation16 + $0x30] sm:$0xff]
    %v549 = vld [vmem:[#allocation16 + $0x38] sm:$0xff]
    %v550 = vld [vmem:[#allocation16 + $0x40] sm:$0xff]
    %v551 = vld [vmem:[#allocation16 + $0x48] sm:$0xff]
    %v552 = vld [vmem:[#allocation16 + $0x50] sm:$0xff]
    %v553 = vld [vmem:[#allocation16 + $0x58] sm:$0xff]
    %v554 = vld [vmem:[#allocation16 + $0x60] sm:$0xff]
    %v555 = vld [vmem:[#allocation16 + $0x68] sm:$0xff]
    %v556 = vld [vmem:[#allocation16 + $0x70] sm:$0xff]
    %v557 = vld [vmem:[#allocation16 + $0x78] sm:$0xff]
    %558 = vmatprep.subr.mxu0 0.0
    %559 = vmatpush1.msra.mxu0 %v542
    %560 = vmatprep.subr.mxu0 0.0
    %561 = vmatpush1.msra.mxu0 %v543
    %562 = vmatprep.subr.mxu0 0.0
    %563 = vmatpush1.msra.mxu0 %v544
    %564 = vmatprep.subr.mxu0 0.0
    %565 = vmatpush1.msra.mxu0 %v545
    %566 = vmatprep.subr.mxu0 0.0
    %567 = vmatpush1.msra.mxu0 %v546
    %568 = vmatprep.subr.mxu0 0.0
    %569 = vmatpush1.msra.mxu0 %v547
    %570 = vmatprep.subr.mxu0 0.0
    %571 = vmatpush1.msra.mxu0 %v548
    %572 = vmatprep.subr.mxu0 0.0
    %573 = vmatpush1.msra.mxu0 %v549
    %574 = vmatprep.subr.mxu0 0.0
    %575 = vmatpush1.msra.mxu0 %v550
    %576 = vmatprep.subr.mxu0 0.0
    %577 = vmatpush1.msra.mxu0 %v551
    %578 = vmatprep.subr.mxu0 0.0
    %579 = vmatpush1.msra.mxu0 %v552
    %580 = vmatprep.subr.mxu0 0.0
    %581 = vmatpush1.msra.mxu0 %v553
    %582 = vmatprep.subr.mxu0 0.0
    %583 = vmatpush1.msra.mxu0 %v554
    %584 = vmatprep.subr.mxu0 0.0
    %585 = vmatpush1.msra.mxu0 %v555
    %586 = vmatprep.subr.mxu0 0.0
    %587 = vmatpush1.msra.mxu0 %v556
    %588 = vmatprep.subr.mxu0 0.0
    %589 = vmatpush1.msra.mxu0 %v557
    %590 = vmatprep.subr.mxu0 0.0
    %591 = vmatpush1.msra.mxu0 0.0
    %592 = vmatprep.subr.mxu0 0.0
    %593 = vmatpush1.msra.mxu0 0.0
    %594 = vmatprep.subr.mxu0 0.0
    %595 = vmatpush1.msra.mxu0 0.0
    %596 = vmatprep.subr.mxu0 0.0
    %597 = vmatpush1.msra.mxu0 0.0
    %598 = vmatprep.subr.mxu0 0.0
    %599 = vmatpush1.msra.mxu0 0.0
    %600 = vmatprep.subr.mxu0 0.0
    %601 = vmatpush1.msra.mxu0 0.0
    %602 = vmatprep.subr.mxu0 0.0
    %603 = vmatpush1.msra.mxu0 0.0
    %604 = vmatprep.subr.mxu0 0.0
    %605 = vmatpush1.msra.mxu0 0.0
    %606 = vmatprep.subr.mxu0 0.0
    %607 = vmatpush1.msra.mxu0 0.0
    %608 = vmatprep.subr.mxu0 0.0
    %609 = vmatpush1.msra.mxu0 0.0
    %610 = vmatprep.subr.mxu0 0.0
    %611 = vmatpush1.msra.mxu0 0.0
    %612 = vmatprep.subr.mxu0 0.0
    %613 = vmatpush1.msra.mxu0 0.0
    %614 = vmatprep.subr.mxu0 0.0
    %615 = vmatpush1.msra.mxu0 0.0
    %616 = vmatprep.subr.mxu0 0.0
    %617 = vmatpush1.msra.mxu0 0.0
    %618 = vmatprep.subr.mxu0 0.0
    %619 = vmatpush1.msra.mxu0 0.0
    %620 = vmatprep.subr.mxu0 0.0
    %621 = vmatpush1.msra.mxu0 0.0
    %622 = vmatprep.mubr.f32.mxu0 0.0
    %623 = vmatmul.mubr.f32.gmra.mrb[0].mxu0 %v538
    %v624 = vpop.f32.mrb[0].mxu0
    %v625 = vadd.f32 0.0, %v624
    %v626 = vpop.f32.mrb[0].mxu0
    %627 = vdwg.mxu0
    %v629 = vsel %vm270, %v541, 0
    %631 = vmatprep.subr.mxu0 0.0
    %632 = vmatpush1.msra.mxu0 %v539
    %633 = vmatprep.subr.mxu0 0.0
    %634 = vmatpush1.msra.mxu0 %v540
    %635 = vmatprep.subr.mxu0 0.0
    %636 = vmatpush1.msra.mxu0 %v629
    %637 = vmatprep.subr.mxu0 0.0
    %638 = vmatpush1.msra.mxu0 0.0
    %639 = vmatprep.subr.mxu0 0.0
    %640 = vmatpush1.msra.mxu0 0.0
    %641 = vmatprep.subr.mxu0 0.0
    %642 = vmatpush1.msra.mxu0 0.0
    %643 = vmatprep.subr.mxu0 0.0
    %644 = vmatpush1.msra.mxu0 0.0
    %645 = vmatprep.subr.mxu0 0.0
    %646 = vmatpush1.msra.mxu0 0.0
    %647 = vmatprep.subr.mxu0 0.0
    %648 = vmatpush1.msra.mxu0 0.0
    %649 = vmatprep.subr.mxu0 0.0
    %650 = vmatpush1.msra.mxu0 0.0
    %651 = vmatprep.subr.mxu0 0.0
    %652 = vmatpush1.msra.mxu0 0.0
    %653 = vmatprep.subr.mxu0 0.0
    %654 = vmatpush1.msra.mxu0 0.0
    %655 = vmatprep.subr.mxu0 0.0
    %656 = vmatpush1.msra.mxu0 0.0
    %657 = vmatprep.subr.mxu0 0.0
    %658 = vmatpush1.msra.mxu0 0.0
    %659 = vmatprep.subr.mxu0 0.0
    %660 = vmatpush1.msra.mxu0 0.0
    %661 = vmatprep.subr.mxu0 0.0
    %662 = vmatpush1.msra.mxu0 0.0
    %663 = vmatprep.subr.mxu0 0.0
    %664 = vmatpush1.msra.mxu0 0.0
    %665 = vmatprep.subr.mxu0 0.0
    %666 = vmatpush1.msra.mxu0 0.0
    %667 = vmatprep.subr.mxu0 0.0
    %668 = vmatpush1.msra.mxu0 0.0
    %669 = vmatprep.subr.mxu0 0.0
    %670 = vmatpush1.msra.mxu0 0.0
    %671 = vmatprep.subr.mxu0 0.0
    %672 = vmatpush1.msra.mxu0 0.0
    %673 = vmatprep.subr.mxu0 0.0
    %674 = vmatpush1.msra.mxu0 0.0
    %675 = vmatprep.subr.mxu0 0.0
    %676 = vmatpush1.msra.mxu0 0.0
    %677 = vmatprep.subr.mxu0 0.0
    %678 = vmatpush1.msra.mxu0 0.0
    %679 = vmatprep.subr.mxu0 0.0
    %680 = vmatpush1.msra.mxu0 0.0
    %681 = vmatprep.subr.mxu0 0.0
    %682 = vmatpush1.msra.mxu0 0.0
    %683 = vmatprep.subr.mxu0 0.0
    %684 = vmatpush1.msra.mxu0 0.0
    %685 = vmatprep.subr.mxu0 0.0
    %686 = vmatpush1.msra.mxu0 0.0
    %687 = vmatprep.subr.mxu0 0.0
    %688 = vmatpush1.msra.mxu0 0.0
    %689 = vmatprep.subr.mxu0 0.0
    %690 = vmatpush1.msra.mxu0 0.0
    %691 = vmatprep.subr.mxu0 0.0
    %692 = vmatpush1.msra.mxu0 0.0
    %693 = vmatprep.subr.mxu0 0.0
    %694 = vmatpush1.msra.mxu0 0.0
    %695 = vmatprep.mubr.f32.mxu0 0.0
    %696 = vmatmul.mubr.f32.gmra.mrb[0].mxu0 %v268
    %v697 = vpop.f32.mrb[0].mxu0
    %v698 = vadd.f32 %v625, %v697
    %v699 = vpop.f32.mrb[0].mxu0
    %700 = vdwg.mxu0
    %v701 = vld [vmem:[#allocation17] sm:$0x1]
    %v703 = vlaneseq
    %v704 = vshrl.u32 %v703, 7
    %v705 = vsub.s32 0, %v704
    %v706 = vrot.slane %v701, %v705
    %v708 = vadd.f32 %v698, %v706
    %vm709 = vcmp.gt.f32.partialorder %v708, 0.0
    %v710 = vmul.f32 %v708, 0.2
    %v711 = vsel %vm709, %v708, %v710
    %v712 = vld [vmem:[#allocation19] sm:$0xff]
    %v713 = vld [vmem:[#allocation19 + $0x8] sm:$0xff]
    %v714 = vld [vmem:[#allocation19 + $0x10] sm:$0xff]
    %v715 = vld [vmem:[#allocation19 + $0x18] sm:$0xff]
    %v716 = vld [vmem:[#allocation19 + $0x20] sm:$0xff]
    %v717 = vld [vmem:[#allocation19 + $0x28] sm:$0xff]
    %v718 = vld [vmem:[#allocation19 + $0x30] sm:$0xff]
    %v719 = vld [vmem:[#allocation19 + $0x38] sm:$0xff]
    %v720 = vld [vmem:[#allocation19 + $0x40] sm:$0xff]
    %v721 = vld [vmem:[#allocation19 + $0x48] sm:$0xff]
    %v722 = vld [vmem:[#allocation19 + $0x50] sm:$0xff]
    %v723 = vld [vmem:[#allocation19 + $0x58] sm:$0xff]
    %v724 = vld [vmem:[#allocation19 + $0x60] sm:$0xff]
    %v725 = vld [vmem:[#allocation19 + $0x68] sm:$0xff]
    %v726 = vld [vmem:[#allocation19 + $0x70] sm:$0xff]
    %v727 = vld [vmem:[#allocation19 + $0x78] sm:$0xff]
    %v728 = vld [vmem:[#allocation20] sm:$0x1]
    %v730 = vlaneseq
    %v731 = vshrl.u32 %v730, 7
    %v732 = vsub.s32 0, %v731
    %v733 = vrot.slane %v728, %v732
    %735 = vmatprep.subr.mxu0 0.0
    %736 = vmatpush1.msra.mxu0 %v712
    %737 = vmatprep.subr.mxu0 0.0
    %738 = vmatpush1.msra.mxu0 %v713
    %739 = vmatprep.subr.mxu0 0.0
    %740 = vmatpush1.msra.mxu0 %v714
    %741 = vmatprep.subr.mxu0 0.0
    %742 = vmatpush1.msra.mxu0 %v715
    %743 = vmatprep.subr.mxu0 0.0
    %744 = vmatpush1.msra.mxu0 %v716
    %745 = vmatprep.subr.mxu0 0.0
    %746 = vmatpush1.msra.mxu0 %v717
    %747 = vmatprep.subr.mxu0 0.0
    %748 = vmatpush1.msra.mxu0 %v718
    %749 = vmatprep.subr.mxu0 0.0
    %750 = vmatpush1.msra.mxu0 %v719
    %751 = vmatprep.subr.mxu0 0.0
    %752 = vmatpush1.msra.mxu0 %v720
    %753 = vmatprep.subr.mxu0 0.0
    %754 = vmatpush1.msra.mxu0 %v721
    %755 = vmatprep.subr.mxu0 0.0
    %756 = vmatpush1.msra.mxu0 %v722
    %757 = vmatprep.subr.mxu0 0.0
    %758 = vmatpush1.msra.mxu0 %v723
    %759 = vmatprep.subr.mxu0 0.0
    %760 = vmatpush1.msra.mxu0 %v724
    %761 = vmatprep.subr.mxu0 0.0
    %762 = vmatpush1.msra.mxu0 %v725
    %763 = vmatprep.subr.mxu0 0.0
    %764 = vmatpush1.msra.mxu0 %v726
    %765 = vmatprep.subr.mxu0 0.0
    %766 = vmatpush1.msra.mxu0 %v727
    %767 = vmatprep.subr.mxu0 0.0
    %768 = vmatpush1.msra.mxu0 0.0
    %769 = vmatprep.subr.mxu0 0.0
    %770 = vmatpush1.msra.mxu0 0.0
    %771 = vmatprep.subr.mxu0 0.0
    %772 = vmatpush1.msra.mxu0 0.0
    %773 = vmatprep.subr.mxu0 0.0
    %774 = vmatpush1.msra.mxu0 0.0
    %775 = vmatprep.subr.mxu0 0.0
    %776 = vmatpush1.msra.mxu0 0.0
    %777 = vmatprep.subr.mxu0 0.0
    %778 = vmatpush1.msra.mxu0 0.0
    %779 = vmatprep.subr.mxu0 0.0
    %780 = vmatpush1.msra.mxu0 0.0
    %781 = vmatprep.subr.mxu0 0.0
    %782 = vmatpush1.msra.mxu0 0.0
    %783 = vmatprep.subr.mxu0 0.0
    %784 = vmatpush1.msra.mxu0 0.0
    %785 = vmatprep.subr.mxu0 0.0
    %786 = vmatpush1.msra.mxu0 0.0
    %787 = vmatprep.subr.mxu0 0.0
    %788 = vmatpush1.msra.mxu0 0.0
    %789 = vmatprep.subr.mxu0 0.0
    %790 = vmatpush1.msra.mxu0 0.0
    %791 = vmatprep.subr.mxu0 0.0
    %792 = vmatpush1.msra.mxu0 0.0
    %793 = vmatprep.subr.mxu0 0.0
    %794 = vmatpush1.msra.mxu0 0.0
    %795 = vmatprep.subr.mxu0 0.0
    %796 = vmatpush1.msra.mxu0 0.0
    %797 = vmatprep.subr.mxu0 0.0
    %798 = vmatpush1.msra.mxu0 0.0
    %799 = vmatprep.mubr.f32.mxu0 0.0
    %800 = vmatmul.mubr.f32.gmra.mrb[0].mxu0 %v711
    %v801 = vpop.f32.mrb[0].mxu0
    %v802 = vadd.f32 %v733, %v801
    %v803 = vpop.f32.mrb[0].mxu0
    %804 = vdwg.mxu0
    %vm805 = vcmp.gt.f32.partialorder %v802, 0.0
    %v806 = vmul.f32 %v802, 0.2
    %v807 = vsel %vm805, %v802, %v806
    %v808 = vld [vmem:[#allocation22] sm:$0xff]
    %v809 = vld [vmem:[#allocation22 + $0x8] sm:$0xff]
    %v810 = vld [vmem:[#allocation22 + $0x10] sm:$0xff]
    %v811 = vld [vmem:[#allocation22 + $0x18] sm:$0xff]
    %v812 = vld [vmem:[#allocation22 + $0x20] sm:$0xff]
    %v813 = vld [vmem:[#allocation22 + $0x28] sm:$0xff]
    %v814 = vld [vmem:[#allocation22 + $0x30] sm:$0xff]
    %v815 = vld [vmem:[#allocation22 + $0x38] sm:$0xff]
    %v816 = vld [vmem:[#allocation22 + $0x40] sm:$0xff]
    %v817 = vld [vmem:[#allocation22 + $0x48] sm:$0xff]
    %v818 = vld [vmem:[#allocation22 + $0x50] sm:$0xff]
    %v819 = vld [vmem:[#allocation22 + $0x58] sm:$0xff]
    %v820 = vld [vmem:[#allocation22 + $0x60] sm:$0xff]
    %v821 = vld [vmem:[#allocation22 + $0x68] sm:$0xff]
    %v822 = vld [vmem:[#allocation22 + $0x70] sm:$0xff]
    %v823 = vld [vmem:[#allocation22 + $0x78] sm:$0xff]
    %v824 = vld [vmem:[#allocation23] sm:$0x1]
    %v826 = vlaneseq
    %v827 = vshrl.u32 %v826, 7
    %v828 = vsub.s32 0, %v827
    %v829 = vrot.slane %v824, %v828
    %831 = vmatprep.subr.mxu0 0.0
    %832 = vmatpush1.msra.mxu0 %v808
    %833 = vmatprep.subr.mxu0 0.0
    %834 = vmatpush1.msra.mxu0 %v809
    %835 = vmatprep.subr.mxu0 0.0
    %836 = vmatpush1.msra.mxu0 %v810
    %837 = vmatprep.subr.mxu0 0.0
    %838 = vmatpush1.msra.mxu0 %v811
    %839 = vmatprep.subr.mxu0 0.0
    %840 = vmatpush1.msra.mxu0 %v812
    %841 = vmatprep.subr.mxu0 0.0
    %842 = vmatpush1.msra.mxu0 %v813
    %843 = vmatprep.subr.mxu0 0.0
    %844 = vmatpush1.msra.mxu0 %v814
    %845 = vmatprep.subr.mxu0 0.0
    %846 = vmatpush1.msra.mxu0 %v815
    %847 = vmatprep.subr.mxu0 0.0
    %848 = vmatpush1.msra.mxu0 %v816
    %849 = vmatprep.subr.mxu0 0.0
    %850 = vmatpush1.msra.mxu0 %v817
    %851 = vmatprep.subr.mxu0 0.0
    %852 = vmatpush1.msra.mxu0 %v818
    %853 = vmatprep.subr.mxu0 0.0
    %854 = vmatpush1.msra.mxu0 %v819
    %855 = vmatprep.subr.mxu0 0.0
    %856 = vmatpush1.msra.mxu0 %v820
    %857 = vmatprep.subr.mxu0 0.0
    %858 = vmatpush1.msra.mxu0 %v821
    %859 = vmatprep.subr.mxu0 0.0
    %860 = vmatpush1.msra.mxu0 %v822
    %861 = vmatprep.subr.mxu0 0.0
    %862 = vmatpush1.msra.mxu0 %v823
    %863 = vmatprep.subr.mxu0 0.0
    %864 = vmatpush1.msra.mxu0 0.0
    %865 = vmatprep.subr.mxu0 0.0
    %866 = vmatpush1.msra.mxu0 0.0
    %867 = vmatprep.subr.mxu0 0.0
    %868 = vmatpush1.msra.mxu0 0.0
    %869 = vmatprep.subr.mxu0 0.0
    %870 = vmatpush1.msra.mxu0 0.0
    %871 = vmatprep.subr.mxu0 0.0
    %872 = vmatpush1.msra.mxu0 0.0
    %873 = vmatprep.subr.mxu0 0.0
    %874 = vmatpush1.msra.mxu0 0.0
    %875 = vmatprep.subr.mxu0 0.0
    %876 = vmatpush1.msra.mxu0 0.0
    %877 = vmatprep.subr.mxu0 0.0
    %878 = vmatpush1.msra.mxu0 0.0
    %879 = vmatprep.subr.mxu0 0.0
    %880 = vmatpush1.msra.mxu0 0.0
    %881 = vmatprep.subr.mxu0 0.0
    %882 = vmatpush1.msra.mxu0 0.0
    %883 = vmatprep.subr.mxu0 0.0
    %884 = vmatpush1.msra.mxu0 0.0
    %885 = vmatprep.subr.mxu0 0.0
    %886 = vmatpush1.msra.mxu0 0.0
    %887 = vmatprep.subr.mxu0 0.0
    %888 = vmatpush1.msra.mxu0 0.0
    %889 = vmatprep.subr.mxu0 0.0
    %890 = vmatpush1.msra.mxu0 0.0
    %891 = vmatprep.subr.mxu0 0.0
    %892 = vmatpush1.msra.mxu0 0.0
    %893 = vmatprep.subr.mxu0 0.0
    %894 = vmatpush1.msra.mxu0 0.0
    %895 = vmatprep.mubr.f32.mxu0 0.0
    %896 = vmatmul.mubr.f32.gmra.mrb[0].mxu0 %v807
    %v897 = vpop.f32.mrb[0].mxu0
    %v898 = vadd.f32 %v829, %v897
    %v899 = vpop.f32.mrb[0].mxu0
    %900 = vdwg.mxu0
    %vm901 = vcmp.gt.f32.partialorder %v898, 0.0
    %v902 = vmul.f32 %v898, 0.2
    %v903 = vsel %vm901, %v898, %v902
    %v904 = vld [vmem:[#allocation25] sm:$0xff]
    %v905 = vld [vmem:[#allocation25 + $0x8] sm:$0xff]
    %v906 = vld [vmem:[#allocation25 + $0x10] sm:$0xff]
    %v907 = vld [vmem:[#allocation25 + $0x18] sm:$0xff]
    %v908 = vld [vmem:[#allocation25 + $0x20] sm:$0xff]
    %v909 = vld [vmem:[#allocation25 + $0x28] sm:$0xff]
    %v910 = vld [vmem:[#allocation25 + $0x30] sm:$0xff]
    %v911 = vld [vmem:[#allocation25 + $0x38] sm:$0xff]
    %v912 = vld [vmem:[#allocation25 + $0x40] sm:$0xff]
    %v913 = vld [vmem:[#allocation25 + $0x48] sm:$0xff]
    %v914 = vld [vmem:[#allocation25 + $0x50] sm:$0xff]
    %v915 = vld [vmem:[#allocation25 + $0x58] sm:$0xff]
    %v916 = vld [vmem:[#allocation25 + $0x60] sm:$0xff]
    %v917 = vld [vmem:[#allocation25 + $0x68] sm:$0xff]
    %v918 = vld [vmem:[#allocation25 + $0x70] sm:$0xff]
    %v919 = vld [vmem:[#allocation25 + $0x78] sm:$0xff]
    %v920 = vld [vmem:[#allocation26] sm:$0x1]
    %v922 = vlaneseq
    %v923 = vshrl.u32 %v922, 7
    %v924 = vsub.s32 0, %v923
    %v925 = vrot.slane %v920, %v924
    %927 = vmatprep.subr.mxu0 0.0
    %928 = vmatpush1.msra.mxu0 %v904
    %929 = vmatprep.subr.mxu0 0.0
    %930 = vmatpush1.msra.mxu0 %v905
    %931 = vmatprep.subr.mxu0 0.0
    %932 = vmatpush1.msra.mxu0 %v906
    %933 = vmatprep.subr.mxu0 0.0
    %934 = vmatpush1.msra.mxu0 %v907
    %935 = vmatprep.subr.mxu0 0.0
    %936 = vmatpush1.msra.mxu0 %v908
    %937 = vmatprep.subr.mxu0 0.0
    %938 = vmatpush1.msra.mxu0 %v909
    %939 = vmatprep.subr.mxu0 0.0
    %940 = vmatpush1.msra.mxu0 %v910
    %941 = vmatprep.subr.mxu0 0.0
    %942 = vmatpush1.msra.mxu0 %v911
    %943 = vmatprep.subr.mxu0 0.0
    %944 = vmatpush1.msra.mxu0 %v912
    %945 = vmatprep.subr.mxu0 0.0
    %946 = vmatpush1.msra.mxu0 %v913
    %947 = vmatprep.subr.mxu0 0.0
    %948 = vmatpush1.msra.mxu0 %v914
    %949 = vmatprep.subr.mxu0 0.0
    %950 = vmatpush1.msra.mxu0 %v915
    %951 = vmatprep.subr.mxu0 0.0
    %952 = vmatpush1.msra.mxu0 %v916
    %953 = vmatprep.subr.mxu0 0.0
    %954 = vmatpush1.msra.mxu0 %v917
    %955 = vmatprep.subr.mxu0 0.0
    %956 = vmatpush1.msra.mxu0 %v918
    %957 = vmatprep.subr.mxu0 0.0
    %958 = vmatpush1.msra.mxu0 %v919
    %959 = vmatprep.subr.mxu0 0.0
    %960 = vmatpush1.msra.mxu0 0.0
    %961 = vmatprep.subr.mxu0 0.0
    %962 = vmatpush1.msra.mxu0 0.0
    %963 = vmatprep.subr.mxu0 0.0
    %964 = vmatpush1.msra.mxu0 0.0
    %965 = vmatprep.subr.mxu0 0.0
    %966 = vmatpush1.msra.mxu0 0.0
    %967 = vmatprep.subr.mxu0 0.0
    %968 = vmatpush1.msra.mxu0 0.0
    %969 = vmatprep.subr.mxu0 0.0
    %970 = vmatpush1.msra.mxu0 0.0
    %971 = vmatprep.subr.mxu0 0.0
    %972 = vmatpush1.msra.mxu0 0.0
    %973 = vmatprep.subr.mxu0 0.0
    %974 = vmatpush1.msra.mxu0 0.0
    %975 = vmatprep.subr.mxu0 0.0
    %976 = vmatpush1.msra.mxu0 0.0
    %977 = vmatprep.subr.mxu0 0.0
    %978 = vmatpush1.msra.mxu0 0.0
    %979 = vmatprep.subr.mxu0 0.0
    %980 = vmatpush1.msra.mxu0 0.0
    %981 = vmatprep.subr.mxu0 0.0
    %982 = vmatpush1.msra.mxu0 0.0
    %983 = vmatprep.subr.mxu0 0.0
    %984 = vmatpush1.msra.mxu0 0.0
    %985 = vmatprep.subr.mxu0 0.0
    %986 = vmatpush1.msra.mxu0 0.0
    %987 = vmatprep.subr.mxu0 0.0
    %988 = vmatpush1.msra.mxu0 0.0
    %989 = vmatprep.subr.mxu0 0.0
    %990 = vmatpush1.msra.mxu0 0.0
    %991 = vmatprep.mubr.f32.mxu0 0.0
    %992 = vmatmul.mubr.f32.gmra.mrb[0].mxu0 %v903
    %v993 = vpop.f32.mrb[0].mxu0
    %v994 = vadd.f32 %v925, %v993
    %v995 = vpop.f32.mrb[0].mxu0
    %996 = vdwg.mxu0
    %997 = vst [vmem:[#allocation28] sm:$0xff] %v994
    // Predicated region
    $region130: #{q_forward.1} parent=1 // pred_check
      _
    $region131: #{q_forward.1} parent=1 // pred_check_branch
      %999 = sbr.rel (0) target = $region133
    $region132: #{q_forward.1} parent=1 // pred_region
      %s1001 = ssub.s32 128, 128
      %1002 = vsyncadd [#allocation4], %s1001
      %s1004 = sshll.u32 [#allocation28], 4
      %s1005 = int_to_ptr.vmem [resolvable:$true] %s1004
      %1007 = dma.vmem_to_hbm [thread:$0]  %s1005, 128, %s16, [#allocation4]
    $region133: #{q_forward.1} parent=1 // pred_fallthru
      _
    // Predicated region
    $region134: #{q_forward.1} parent=1 // pred_check
      _
    $region135: #{q_forward.1} parent=1 // pred_check_branch
      %1009 = sbr.rel (0) target = $region137
    $region136: #{q_forward.1} parent=1 // pred_region
      %1010 = dma.done [#allocation4], 128
    $region137: #{q_forward.1} parent=1 // pred_fallthru
      _
    %1011 = vsyncpa [#allocation3], 1
    %1012 = vsyncpa [#allocation6], 1
    %1013 = vsyncpa [#allocation9], 1
    %1014 = vsyncpa [#allocation12], 1
    %1015 = vsyncpa [#allocation15], 1
    %1016 = vsyncpa [#allocation18], 1
    %1017 = vsyncpa [#allocation21], 1
    %1018 = vsyncpa [#allocation24], 1
    %1019 = vsyncpa [#allocation27], 1
    %1020 = vsyncpa [#allocation4], 1

</llo_original>
